<compile_context>
chip_gen: v7x
topology: tpu7x:2x2x1
jax: 0.10.0
libtpu: 0.0.40
codegen_flags: <defaults>
</compile_context>

<pallas_src>
import functools

import jax
import jax.numpy as jnp
from jax.experimental import pallas as pl
from jax.experimental.pallas import tpu as pltpu


# ----------------------------------------------------------------------------
# Fused kernel: unrolled per-topic encoder + attention accumulation + decoder
# ----------------------------------------------------------------------------
def imae_fused_kernel(x_ref,
                      w1_ref, b1_ref, w2_ref, b2_ref, w3_ref, b3_ref,
                      wc_ref, bc_ref,
                      wa_ref, ba_ref,
                      wd1_ref, bd1_ref, wd2_ref, bd2_ref,
                      wd3_ref, bd3_ref, wd4_ref, bd4_ref,
                      mc_ref, z_ref, xbar_ref,
                      *, topics: int):
    x = x_ref[...]
    cdt = x.dtype

    def dense(h, w, b, relu=True):
        # f32 accumulation on the MXU, elementwise bias+ReLU at compute dtype.
        y = jnp.dot(h, w, preferred_element_type=jnp.float32).astype(cdt) + b
        return jnp.maximum(y, 0.0) if relu else y

    # Mixed_Z accumulator (plain local value, f32).
    acc = jnp.zeros(z_ref.shape, jnp.float32)

    # Per-topic encoders, fully unrolled (topics is a small static int).
    for t in range(topics):
        h = dense(x, w1_ref[t], b1_ref[t])
        h = dense(h, w2_ref[t], b2_ref[t])
        h = dense(h, w3_ref[t], b3_ref[t])
        c = dense(h, wc_ref[t], bc_ref[t], relu=False)        # C_t
        mc_ref[t] = c.astype(mc_ref.dtype)
        # attention, accumulated per topic:
        #   Mixed_Z = sum_t C_t @ Wa_t + ba
        # (identical to Linear(concat(Muti_C, -1)) with Wa_t = Wa[t*nz:(t+1)*nz])
        acc = acc + jnp.dot(c, wa_ref[t], preferred_element_type=jnp.float32)

    z = acc + ba_ref[...]
    z_ref[...] = z.astype(z_ref.dtype)

    # decoder chain (runs once per batch tile, everything stays in VMEM)
    h = z.astype(cdt)
    h = dense(h, wd1_ref[...], bd1_ref[...])
    h = dense(h, wd2_ref[...], bd2_ref[...])
    h = dense(h, wd3_ref[...], bd3_ref[...])
    xbar = dense(h, wd4_ref[...], bd4_ref[...], relu=False)
    xbar_ref[...] = xbar.astype(xbar_ref.dtype)


# ----------------------------------------------------------------------------
# Wrapper (lane-dense padding, batch tiling, VMEM budgeting, single pallas_call)
# ----------------------------------------------------------------------------
def _round_up(x, m):
    return (x + m - 1) // m * m


def _pad_last(a, n):
    if a.shape[-1] == n:
        return a
    cfg = [(0, 0)] * (a.ndim - 1) + [(0, n - a.shape[-1])]
    return jnp.pad(a, cfg)


def _pad_last2(a, r, c):
    if a.shape[-2] == r and a.shape[-1] == c:
        return a
    cfg = [(0, 0)] * (a.ndim - 2) + [(0, r - a.shape[-2]), (0, c - a.shape[-1])]
    return jnp.pad(a, cfg)


def imae_forward(X, params, *, compute_dtype=jnp.float32,
                 lane=128, max_batch_tile=None):
    (W1, b1, W2, b2, W3, b3, Wc, bc,
     Wa, ba, Wd1, bd1, Wd2, bd2, Wd3, bd3, Wd4, bd4) = params

    T = W1.shape[0]
    B, n_in = X.shape
    n_e1, n_e2, n_e3 = W1.shape[2], W2.shape[2], W3.shape[2]
    n_z = Wc.shape[2]
    n_d1, n_d2, n_d3 = Wd1.shape[1], Wd2.shape[1], Wd3.shape[1]

    # lane padding targets (zero padding is exact through Linear + ReLU)
    pi, pe1, pe2, pe3 = (_round_up(d, lane) for d in (n_in, n_e1, n_e2, n_e3))
    pz, pd1, pd2, pd3 = (_round_up(d, lane) for d in (n_z, n_d1, n_d2, n_d3))

    cdt = jnp.dtype(compute_dtype)
    is_bf16 = cdt == jnp.dtype(jnp.bfloat16)
    sub = 16 if is_bf16 else 8          # 16-sublane tiles for packed bf16
    elt = cdt.itemsize

    # --- best-effort hardware probing (trace-time, falls back safely) -------
    try:
        vmem_cap = int(pltpu.get_tpu_info().vmem_capacity_bytes)
    except Exception:
        vmem_cap = 64 << 20             # conservative (true for v7x per-TC)
    try:
        kind = jax.devices()[0].device_kind.lower()
    except Exception:
        kind = ""
    is_v7 = "v7" in kind
    vmem_budget = int(0.75 * vmem_cap)

    # --- VMEM resident-set estimate (2x for double buffering) ---------------
    w_elems = (T * (pi * pe1 + pe1 * pe2 + pe2 * pe3 + pe3 * pz + pz * pz)
               + pz * pd1 + pd1 * pd2 + pd2 * pd3 + pd3 * pi)
    b_elems = (T * (pe1 + pe2 + pe3 + pz) + pz
               + pd1 + pd2 + pd3 + pi)

    def vmem_est(tile):
        io = elt * tile * pi + elt * (T * tile * pz + tile * pz + tile * pi)
        return 2 * io + 2 * elt * (w_elems + b_elems)

    # --- batch tile selection ------------------------------------------------
    if max_batch_tile is None:
        max_batch_tile = 256 if is_v7 else 512   # smaller tiles on 64 MiB v7x
    bt = min(_round_up(B, sub), _round_up(max_batch_tile, sub))
    if is_v7:
        # make sure the "parallel" batch axis has >=2 steps so both v7x
        # TensorCores get work, when the batch is big enough to split.
        half = _round_up(max((B + 1) // 2, 1), sub)
        if half < _round_up(B, sub):
            bt = min(bt, half)
    while bt > sub and vmem_est(bt) > vmem_budget:
        bt = max(sub, _round_up(bt // 2, sub))
    Bp = _round_up(B, bt)
    nbt = Bp // bt

    vmem_limit = int(min(vmem_budget, max(32 << 20, 2 * vmem_est(bt))))

    # --- pad & cast operands -------------------------------------------------
    Xp = _pad_last2(X, Bp, pi).astype(cdt)
    W1p = _pad_last2(W1, pi, pe1).astype(cdt);   b1p = _pad_last(b1, pe1).astype(cdt)
    W2p = _pad_last2(W2, pe1, pe2).astype(cdt);  b2p = _pad_last(b2, pe2).astype(cdt)
    W3p = _pad_last2(W3, pe2, pe3).astype(cdt);  b3p = _pad_last(b3, pe3).astype(cdt)
    Wcp = _pad_last2(Wc, pe3, pz).astype(cdt);   bcp = _pad_last(bc, pz).astype(cdt)
    # attention weight split per topic: (T*n_z, n_z) -> (T, n_z, n_z), padded
    Wap = _pad_last2(Wa.reshape(T, n_z, n_z), pz, pz).astype(cdt)
    bap = _pad_last(ba, pz).astype(cdt)
    Wd1p = _pad_last2(Wd1, pz, pd1).astype(cdt);  bd1p = _pad_last(bd1, pd1).astype(cdt)
    Wd2p = _pad_last2(Wd2, pd1, pd2).astype(cdt); bd2p = _pad_last(bd2, pd2).astype(cdt)
    Wd3p = _pad_last2(Wd3, pd2, pd3).astype(cdt); bd3p = _pad_last(bd3, pd3).astype(cdt)
    Wd4p = _pad_last2(Wd4, pd3, pi).astype(cdt);  bd4p = _pad_last(bd4, pi).astype(cdt)

    # all weights/biases use constant index maps: one DMA set per batch tile
    topic3 = lambda shape: pl.BlockSpec(shape, lambda b: (0, 0, 0))
    shared2 = lambda shape: pl.BlockSpec(shape, lambda b: (0, 0))

    flops = 2 * Bp * (T * (pi * pe1 + pe1 * pe2 + pe2 * pe3 + pe3 * pz + pz * pz)
                      + pz * pd1 + pd1 * pd2 + pd2 * pd3 + pd3 * pi)
    bytes_accessed = (elt * Bp * pi                       # X read
                      + nbt * elt * (w_elems + b_elems)   # weights per tile
                      + elt * (T * Bp * pz + Bp * pz + Bp * pi))  # outputs
    cost = pl.CostEstimate(flops=int(flops), transcendentals=0,
                           bytes_accessed=int(bytes_accessed))

    mc_p, z_p, xbar_p = pl.pallas_call(
        functools.partial(imae_fused_kernel, topics=T),
        out_shape=(jax.ShapeDtypeStruct((T, Bp, pz), cdt),   # Muti_C (stacked)
                   jax.ShapeDtypeStruct((Bp, pz), cdt),      # Mixed_Z
                   jax.ShapeDtypeStruct((Bp, pi), cdt)),     # Xbar
        grid=(nbt,),
        in_specs=[
            pl.BlockSpec((bt, pi), lambda b: (b, 0)),         # X tile
            topic3((T, pi, pe1)), topic3((T, 1, pe1)),        # W1, b1
            topic3((T, pe1, pe2)), topic3((T, 1, pe2)),       # W2, b2
            topic3((T, pe2, pe3)), topic3((T, 1, pe3)),       # W3, b3
            topic3((T, pe3, pz)), topic3((T, 1, pz)),         # Wc, bc
            topic3((T, pz, pz)),                              # Wa (per topic)
            shared2((1, pz)),                                 # ba
            shared2((pz, pd1)), shared2((1, pd1)),            # Wd1, bd1
            shared2((pd1, pd2)), shared2((1, pd2)),           # Wd2, bd2
            shared2((pd2, pd3)), shared2((1, pd3)),           # Wd3, bd3
            shared2((pd3, pi)), shared2((1, pi)),             # Wd4, bd4
        ],
        out_specs=(
            pl.BlockSpec((T, bt, pz), lambda b: (0, b, 0)),   # Muti_C
            pl.BlockSpec((bt, pz), lambda b: (b, 0)),         # Mixed_Z
            pl.BlockSpec((bt, pi), lambda b: (b, 0)),         # Xbar
        ),
        compiler_params=pltpu.CompilerParams(
            dimension_semantics=("parallel",),
            vmem_limit_bytes=vmem_limit),
        cost_estimate=cost,
    )(Xp, W1p, b1p, W2p, b2p, W3p, b3p, Wcp, bcp, Wap, bap,
      Wd1p, bd1p, Wd2p, bd2p, Wd3p, bd3p, Wd4p, bd4p)

    # slice off lane/batch padding; Muti_C returned stacked (T, B, n_z)
    return xbar_p[:B, :n_in], z_p[:B, :n_z], mc_p[:, :B, :n_z]


# ----------------------------------------------------------------------------
# Deterministic parameter init (PyTorch-Linear-style uniform)
# ----------------------------------------------------------------------------
def _linear_init(key, fan_in, fan_out, lead=None):
    k = 1.0 / jnp.sqrt(jnp.float32(fan_in))
    kw, kb = jax.random.split(key)
    w_shape = (fan_in, fan_out) if lead is None else (lead, fan_in, fan_out)
    b_shape = (1, fan_out) if lead is None else (lead, 1, fan_out)
    W = jax.random.uniform(kw, w_shape, jnp.float32, -k, k)
    b = jax.random.uniform(kb, b_shape, jnp.float32, -k, k)
    return W, b


def make_params(key, topic_num, n_input, n_enc_1, n_enc_2, n_enc_3,
                n_dec_1, n_dec_2, n_dec_3, n_z):
    keys = jax.random.split(key, 9)
    W1, b1 = _linear_init(keys[0], n_input, n_enc_1, lead=topic_num)
    W2, b2 = _linear_init(keys[1], n_enc_1, n_enc_2, lead=topic_num)
    W3, b3 = _linear_init(keys[2], n_enc_2, n_enc_3, lead=topic_num)
    Wc, bc = _linear_init(keys[3], n_enc_3, n_z, lead=topic_num)
    Wa, ba = _linear_init(keys[4], topic_num * n_z, n_z)
    Wd1, bd1 = _linear_init(keys[5], n_z, n_dec_1)
    Wd2, bd2 = _linear_init(keys[6], n_dec_1, n_dec_2)
    Wd3, bd3 = _linear_init(keys[7], n_dec_2, n_dec_3)
    Wd4, bd4 = _linear_init(keys[8], n_dec_3, n_input)
    return (W1, b1, W2, b2, W3, b3, Wc, bc,
            Wa, ba, Wd1, bd1, Wd2, bd2, Wd3, bd3, Wd4, bd4)


# ----------------------------------------------------------------------------
# Pure-JAX reference (mirrors the PyTorch forward exactly)
# ----------------------------------------------------------------------------
def imae_reference(X, params):
    (W1, b1, W2, b2, W3, b3, Wc, bc,
     Wa, ba, Wd1, bd1, Wd2, bd2, Wd3, bd3, Wd4, bd4) = params
    T = W1.shape[0]
    muti_c = []
    for k in range(T):
        h = jnp.maximum(X @ W1[k] + b1[k], 0.0)
        h = jnp.maximum(h @ W2[k] + b2[k], 0.0)
        h = jnp.maximum(h @ W3[k] + b3[k], 0.0)
        muti_c.append(h @ Wc[k] + bc[k])
    z = jnp.concatenate(muti_c, axis=-1) @ Wa + ba
    h = jnp.maximum(z @ Wd1 + bd1, 0.0)
    h = jnp.maximum(h @ Wd2 + bd2, 0.0)
    h = jnp.maximum(h @ Wd3 + bd3, 0.0)
    xbar = h @ Wd4 + bd4
    return xbar, z, muti_c


if __name__ == "__main__":
    # small shapes consistent with the module
    topic_num = 3
    B = 8
    n_input = 32
    n_enc_1, n_enc_2, n_enc_3 = 64, 64, 32
    n_dec_1, n_dec_2, n_dec_3 = 32, 64, 64
    n_z = 16

    key = jax.random.PRNGKey(0)
    kx, kp = jax.random.split(key)
    X = jax.random.normal(kx, (B, n_input), jnp.float32)
    params = make_params(kp, topic_num, n_input, n_enc_1, n_enc_2, n_enc_3,
                         n_dec_1, n_dec_2, n_dec_3, n_z)

    fwd = jax.jit(functools.partial(imae_forward, compute_dtype=jnp.float32))
    xbar, mixed_z, muti_c = fwd(X, params)
    jax.block_until_ready((xbar, mixed_z, muti_c))

    # correctness check against a pure-JAX reference (f32 path, strict)
    xbar_r, z_r, mc_r = imae_reference(X, params)
    assert jnp.allclose(xbar, xbar_r, atol=1e-4, rtol=1e-4)
    assert jnp.allclose(mixed_z, z_r, atol=1e-4, rtol=1e-4)
    for k in range(topic_num):
        assert jnp.allclose(muti_c[k], mc_r[k], atol=1e-4, rtol=1e-4)

    # bf16 fast path (bf16 weights/activations/outputs, f32 MXU accumulation):
    # compile/run coverage plus a loose numerical gate vs the f32 reference.
    fwd_bf16 = jax.jit(functools.partial(imae_forward,
                                         compute_dtype=jnp.bfloat16))
    xbar_b, z_b, mc_b = fwd_bf16(X, params)
    jax.block_until_ready((xbar_b, z_b, mc_b))
    assert xbar_b.shape == xbar_r.shape
    assert bool(jnp.all(jnp.isfinite(xbar_b.astype(jnp.float32))))
    assert jnp.allclose(xbar_b.astype(jnp.float32), xbar_r, atol=0.15, rtol=0.15)

    print("KERNEL_OK")
</pallas_src>

<mosaic_0001>
module attributes {stable_mosaic.version = 11 : i64} {
  func.func @imae_fused_kernel(%arg0: i32, %arg1: memref<8x128xf32, #tpu.memory_space<vmem>>, %arg2: memref<3x128x128xf32, #tpu.memory_space<vmem>>, %arg3: memref<3x1x128xf32, #tpu.memory_space<vmem>>, %arg4: memref<3x128x128xf32, #tpu.memory_space<vmem>>, %arg5: memref<3x1x128xf32, #tpu.memory_space<vmem>>, %arg6: memref<3x128x128xf32, #tpu.memory_space<vmem>>, %arg7: memref<3x1x128xf32, #tpu.memory_space<vmem>>, %arg8: memref<3x128x128xf32, #tpu.memory_space<vmem>>, %arg9: memref<3x1x128xf32, #tpu.memory_space<vmem>>, %arg10: memref<3x128x128xf32, #tpu.memory_space<vmem>>, %arg11: memref<1x128xf32, #tpu.memory_space<vmem>>, %arg12: memref<128x128xf32, #tpu.memory_space<vmem>>, %arg13: memref<1x128xf32, #tpu.memory_space<vmem>>, %arg14: memref<128x128xf32, #tpu.memory_space<vmem>>, %arg15: memref<1x128xf32, #tpu.memory_space<vmem>>, %arg16: memref<128x128xf32, #tpu.memory_space<vmem>>, %arg17: memref<1x128xf32, #tpu.memory_space<vmem>>, %arg18: memref<128x128xf32, #tpu.memory_space<vmem>>, %arg19: memref<1x128xf32, #tpu.memory_space<vmem>>, %arg20: memref<3x8x128xf32, #tpu.memory_space<vmem>>, %arg21: memref<8x128xf32, #tpu.memory_space<vmem>>, %arg22: memref<8x128xf32, #tpu.memory_space<vmem>>) attributes {dimension_semantics = [#tpu.dimension_semantics<parallel>], iteration_bounds = array<i64: 1>, scalar_prefetch = 0 : i64, scratch_operands = 0 : i64, tpu.core_type = #tpu.core_type<tc>, window_params = [{transform_indices = @transform_0, window_bounds = array<i64: 8, 128>}, {pipeline_mode = #tpu.pipeline_mode<synchronous>, transform_indices = @transform_1, window_bounds = array<i64: 3, 128, 128>}, {pipeline_mode = #tpu.pipeline_mode<synchronous>, transform_indices = @transform_2, window_bounds = array<i64: 3, 1, 128>}, {pipeline_mode = #tpu.pipeline_mode<synchronous>, transform_indices = @transform_3, window_bounds = array<i64: 3, 128, 128>}, {pipeline_mode = #tpu.pipeline_mode<synchronous>, transform_indices = @transform_4, window_bounds = array<i64: 3, 1, 128>}, {pipeline_mode = #tpu.pipeline_mode<synchronous>, transform_indices = @transform_5, window_bounds = array<i64: 3, 128, 128>}, {pipeline_mode = #tpu.pipeline_mode<synchronous>, transform_indices = @transform_6, window_bounds = array<i64: 3, 1, 128>}, {pipeline_mode = #tpu.pipeline_mode<synchronous>, transform_indices = @transform_7, window_bounds = array<i64: 3, 128, 128>}, {pipeline_mode = #tpu.pipeline_mode<synchronous>, transform_indices = @transform_8, window_bounds = array<i64: 3, 1, 128>}, {pipeline_mode = #tpu.pipeline_mode<synchronous>, transform_indices = @transform_9, window_bounds = array<i64: 3, 128, 128>}, {pipeline_mode = #tpu.pipeline_mode<synchronous>, transform_indices = @transform_10, window_bounds = array<i64: 1, 128>}, {pipeline_mode = #tpu.pipeline_mode<synchronous>, transform_indices = @transform_11, window_bounds = array<i64: 128, 128>}, {pipeline_mode = #tpu.pipeline_mode<synchronous>, transform_indices = @transform_12, window_bounds = array<i64: 1, 128>}, {pipeline_mode = #tpu.pipeline_mode<synchronous>, transform_indices = @transform_13, window_bounds = array<i64: 128, 128>}, {pipeline_mode = #tpu.pipeline_mode<synchronous>, transform_indices = @transform_14, window_bounds = array<i64: 1, 128>}, {pipeline_mode = #tpu.pipeline_mode<synchronous>, transform_indices = @transform_15, window_bounds = array<i64: 128, 128>}, {pipeline_mode = #tpu.pipeline_mode<synchronous>, transform_indices = @transform_16, window_bounds = array<i64: 1, 128>}, {pipeline_mode = #tpu.pipeline_mode<synchronous>, transform_indices = @transform_17, window_bounds = array<i64: 128, 128>}, {pipeline_mode = #tpu.pipeline_mode<synchronous>, transform_indices = @transform_18, window_bounds = array<i64: 1, 128>}, {transform_indices = @transform_19, window_bounds = array<i64: 3, 8, 128>}, {transform_indices = @transform_20, window_bounds = array<i64: 8, 128>}, {transform_indices = @transform_21, window_bounds = array<i64: 8, 128>}]} {
    %c0 = arith.constant 0 : index
    %c0_0 = arith.constant 0 : index
    %0 = vector.load %arg1[%c0, %c0_0] : memref<8x128xf32, #tpu.memory_space<vmem>>, vector<8x128xf32>
    %cst = arith.constant 0.000000e+00 : f32
    %1 = vector.broadcast %cst : f32 to vector<8x128xf32>
    %c0_1 = arith.constant 0 : index
    %c0_2 = arith.constant 0 : index
    %c0_3 = arith.constant 0 : index
    %2 = vector.load %arg2[%c0_1, %c0_2, %c0_3] : memref<3x128x128xf32, #tpu.memory_space<vmem>>, vector<1x128x128xf32>
    %3 = vector.shape_cast %2 : vector<1x128x128xf32> to vector<128x128xf32>
    %c0_4 = arith.constant 0 : index
    %c0_5 = arith.constant 0 : index
    %c0_6 = arith.constant 0 : index
    %4 = vector.load %arg3[%c0_4, %c0_5, %c0_6] : memref<3x1x128xf32, #tpu.memory_space<vmem>>, vector<1x1x128xf32>
    %5 = vector.shape_cast %4 : vector<1x1x128xf32> to vector<1x128xf32>
    %cst_7 = arith.constant dense<0.000000e+00> : vector<8x128xf32>
    %6 = tpu.matmul %0, %3, %cst_7 {dimension_numbers = #tpu.dot_dimension_numbers<[1], [0], [0], [1], [0, 0, 1, 1], [], []>} : vector<8x128xf32>, vector<128x128xf32>, vector<8x128xf32> -> vector<8x128xf32>
    %7 = vector.broadcast %5 : vector<1x128xf32> to vector<8x128xf32>
    %8 = arith.addf %6, %7 : vector<8x128xf32>
    %cst_8 = arith.constant 0.000000e+00 : f32
    %9 = vector.broadcast %cst_8 : f32 to vector<8x128xf32>
    %10 = arith.maximumf %8, %9 : vector<8x128xf32>
    %c0_9 = arith.constant 0 : index
    %c0_10 = arith.constant 0 : index
    %c0_11 = arith.constant 0 : index
    %11 = vector.load %arg4[%c0_9, %c0_10, %c0_11] : memref<3x128x128xf32, #tpu.memory_space<vmem>>, vector<1x128x128xf32>
    %12 = vector.shape_cast %11 : vector<1x128x128xf32> to vector<128x128xf32>
    %c0_12 = arith.constant 0 : index
    %c0_13 = arith.constant 0 : index
    %c0_14 = arith.constant 0 : index
    %13 = vector.load %arg5[%c0_12, %c0_13, %c0_14] : memref<3x1x128xf32, #tpu.memory_space<vmem>>, vector<1x1x128xf32>
    %14 = vector.shape_cast %13 : vector<1x1x128xf32> to vector<1x128xf32>
    %cst_15 = arith.constant dense<0.000000e+00> : vector<8x128xf32>
    %15 = tpu.matmul %10, %12, %cst_15 {dimension_numbers = #tpu.dot_dimension_numbers<[1], [0], [0], [1], [0, 0, 1, 1], [], []>} : vector<8x128xf32>, vector<128x128xf32>, vector<8x128xf32> -> vector<8x128xf32>
    %16 = vector.broadcast %14 : vector<1x128xf32> to vector<8x128xf32>
    %17 = arith.addf %15, %16 : vector<8x128xf32>
    %cst_16 = arith.constant 0.000000e+00 : f32
    %18 = vector.broadcast %cst_16 : f32 to vector<8x128xf32>
    %19 = arith.maximumf %17, %18 : vector<8x128xf32>
    %c0_17 = arith.constant 0 : index
    %c0_18 = arith.constant 0 : index
    %c0_19 = arith.constant 0 : index
    %20 = vector.load %arg6[%c0_17, %c0_18, %c0_19] : memref<3x128x128xf32, #tpu.memory_space<vmem>>, vector<1x128x128xf32>
    %21 = vector.shape_cast %20 : vector<1x128x128xf32> to vector<128x128xf32>
    %c0_20 = arith.constant 0 : index
    %c0_21 = arith.constant 0 : index
    %c0_22 = arith.constant 0 : index
    %22 = vector.load %arg7[%c0_20, %c0_21, %c0_22] : memref<3x1x128xf32, #tpu.memory_space<vmem>>, vector<1x1x128xf32>
    %23 = vector.shape_cast %22 : vector<1x1x128xf32> to vector<1x128xf32>
    %cst_23 = arith.constant dense<0.000000e+00> : vector<8x128xf32>
    %24 = tpu.matmul %19, %21, %cst_23 {dimension_numbers = #tpu.dot_dimension_numbers<[1], [0], [0], [1], [0, 0, 1, 1], [], []>} : vector<8x128xf32>, vector<128x128xf32>, vector<8x128xf32> -> vector<8x128xf32>
    %25 = vector.broadcast %23 : vector<1x128xf32> to vector<8x128xf32>
    %26 = arith.addf %24, %25 : vector<8x128xf32>
    %cst_24 = arith.constant 0.000000e+00 : f32
    %27 = vector.broadcast %cst_24 : f32 to vector<8x128xf32>
    %28 = arith.maximumf %26, %27 : vector<8x128xf32>
    %c0_25 = arith.constant 0 : index
    %c0_26 = arith.constant 0 : index
    %c0_27 = arith.constant 0 : index
    %29 = vector.load %arg8[%c0_25, %c0_26, %c0_27] : memref<3x128x128xf32, #tpu.memory_space<vmem>>, vector<1x128x128xf32>
    %30 = vector.shape_cast %29 : vector<1x128x128xf32> to vector<128x128xf32>
    %c0_28 = arith.constant 0 : index
    %c0_29 = arith.constant 0 : index
    %c0_30 = arith.constant 0 : index
    %31 = vector.load %arg9[%c0_28, %c0_29, %c0_30] : memref<3x1x128xf32, #tpu.memory_space<vmem>>, vector<1x1x128xf32>
    %32 = vector.shape_cast %31 : vector<1x1x128xf32> to vector<1x128xf32>
    %cst_31 = arith.constant dense<0.000000e+00> : vector<8x128xf32>
    %33 = tpu.matmul %28, %30, %cst_31 {dimension_numbers = #tpu.dot_dimension_numbers<[1], [0], [0], [1], [0, 0, 1, 1], [], []>} : vector<8x128xf32>, vector<128x128xf32>, vector<8x128xf32> -> vector<8x128xf32>
    %34 = vector.broadcast %32 : vector<1x128xf32> to vector<8x128xf32>
    %35 = arith.addf %33, %34 : vector<8x128xf32>
    %c0_32 = arith.constant 0 : index
    %c0_33 = arith.constant 0 : index
    %c0_34 = arith.constant 0 : index
    %36 = vector.load %arg20[%c0_32, %c0_33, %c0_34] : memref<3x8x128xf32, #tpu.memory_space<vmem>>, vector<1x8x128xf32>
    %37 = vector.shape_cast %36 : vector<1x8x128xf32> to vector<8x128xf32>
    %38 = vector.shape_cast %35 : vector<8x128xf32> to vector<1x8x128xf32>
    tpu.vector_store %arg20[%c0_32, %c0_33, %c0_34], %38 {strides = array<i32>} : memref<3x8x128xf32, #tpu.memory_space<vmem>>, vector<1x8x128xf32>,
    %c0_35 = arith.constant 0 : index
    %c0_36 = arith.constant 0 : index
    %c0_37 = arith.constant 0 : index
    %39 = vector.load %arg10[%c0_35, %c0_36, %c0_37] : memref<3x128x128xf32, #tpu.memory_space<vmem>>, vector<1x128x128xf32>
    %40 = vector.shape_cast %39 : vector<1x128x128xf32> to vector<128x128xf32>
    %cst_38 = arith.constant dense<0.000000e+00> : vector<8x128xf32>
    %41 = tpu.matmul %35, %40, %cst_38 {dimension_numbers = #tpu.dot_dimension_numbers<[1], [0], [0], [1], [0, 0, 1, 1], [], []>} : vector<8x128xf32>, vector<128x128xf32>, vector<8x128xf32> -> vector<8x128xf32>
    %42 = arith.addf %1, %41 : vector<8x128xf32>
    %c1 = arith.constant 1 : index
    %c0_39 = arith.constant 0 : index
    %c0_40 = arith.constant 0 : index
    %43 = vector.load %arg2[%c1, %c0_39, %c0_40] : memref<3x128x128xf32, #tpu.memory_space<vmem>>, vector<1x128x128xf32>
    %44 = vector.shape_cast %43 : vector<1x128x128xf32> to vector<128x128xf32>
    %c1_41 = arith.constant 1 : index
    %c0_42 = arith.constant 0 : index
    %c0_43 = arith.constant 0 : index
    %45 = vector.load %arg3[%c1_41, %c0_42, %c0_43] : memref<3x1x128xf32, #tpu.memory_space<vmem>>, vector<1x1x128xf32>
    %46 = vector.shape_cast %45 : vector<1x1x128xf32> to vector<1x128xf32>
    %cst_44 = arith.constant dense<0.000000e+00> : vector<8x128xf32>
    %47 = tpu.matmul %0, %44, %cst_44 {dimension_numbers = #tpu.dot_dimension_numbers<[1], [0], [0], [1], [0, 0, 1, 1], [], []>} : vector<8x128xf32>, vector<128x128xf32>, vector<8x128xf32> -> vector<8x128xf32>
    %48 = vector.broadcast %46 : vector<1x128xf32> to vector<8x128xf32>
    %49 = arith.addf %47, %48 : vector<8x128xf32>
    %cst_45 = arith.constant 0.000000e+00 : f32
    %50 = vector.broadcast %cst_45 : f32 to vector<8x128xf32>
    %51 = arith.maximumf %49, %50 : vector<8x128xf32>
    %c1_46 = arith.constant 1 : index
    %c0_47 = arith.constant 0 : index
    %c0_48 = arith.constant 0 : index
    %52 = vector.load %arg4[%c1_46, %c0_47, %c0_48] : memref<3x128x128xf32, #tpu.memory_space<vmem>>, vector<1x128x128xf32>
    %53 = vector.shape_cast %52 : vector<1x128x128xf32> to vector<128x128xf32>
    %c1_49 = arith.constant 1 : index
    %c0_50 = arith.constant 0 : index
    %c0_51 = arith.constant 0 : index
    %54 = vector.load %arg5[%c1_49, %c0_50, %c0_51] : memref<3x1x128xf32, #tpu.memory_space<vmem>>, vector<1x1x128xf32>
    %55 = vector.shape_cast %54 : vector<1x1x128xf32> to vector<1x128xf32>
    %cst_52 = arith.constant dense<0.000000e+00> : vector<8x128xf32>
    %56 = tpu.matmul %51, %53, %cst_52 {dimension_numbers = #tpu.dot_dimension_numbers<[1], [0], [0], [1], [0, 0, 1, 1], [], []>} : vector<8x128xf32>, vector<128x128xf32>, vector<8x128xf32> -> vector<8x128xf32>
    %57 = vector.broadcast %55 : vector<1x128xf32> to vector<8x128xf32>
    %58 = arith.addf %56, %57 : vector<8x128xf32>
    %cst_53 = arith.constant 0.000000e+00 : f32
    %59 = vector.broadcast %cst_53 : f32 to vector<8x128xf32>
    %60 = arith.maximumf %58, %59 : vector<8x128xf32>
    %c1_54 = arith.constant 1 : index
    %c0_55 = arith.constant 0 : index
    %c0_56 = arith.constant 0 : index
    %61 = vector.load %arg6[%c1_54, %c0_55, %c0_56] : memref<3x128x128xf32, #tpu.memory_space<vmem>>, vector<1x128x128xf32>
    %62 = vector.shape_cast %61 : vector<1x128x128xf32> to vector<128x128xf32>
    %c1_57 = arith.constant 1 : index
    %c0_58 = arith.constant 0 : index
    %c0_59 = arith.constant 0 : index
    %63 = vector.load %arg7[%c1_57, %c0_58, %c0_59] : memref<3x1x128xf32, #tpu.memory_space<vmem>>, vector<1x1x128xf32>
    %64 = vector.shape_cast %63 : vector<1x1x128xf32> to vector<1x128xf32>
    %cst_60 = arith.constant dense<0.000000e+00> : vector<8x128xf32>
    %65 = tpu.matmul %60, %62, %cst_60 {dimension_numbers = #tpu.dot_dimension_numbers<[1], [0], [0], [1], [0, 0, 1, 1], [], []>} : vector<8x128xf32>, vector<128x128xf32>, vector<8x128xf32> -> vector<8x128xf32>
    %66 = vector.broadcast %64 : vector<1x128xf32> to vector<8x128xf32>
    %67 = arith.addf %65, %66 : vector<8x128xf32>
    %cst_61 = arith.constant 0.000000e+00 : f32
    %68 = vector.broadcast %cst_61 : f32 to vector<8x128xf32>
    %69 = arith.maximumf %67, %68 : vector<8x128xf32>
    %c1_62 = arith.constant 1 : index
    %c0_63 = arith.constant 0 : index
    %c0_64 = arith.constant 0 : index
    %70 = vector.load %arg8[%c1_62, %c0_63, %c0_64] : memref<3x128x128xf32, #tpu.memory_space<vmem>>, vector<1x128x128xf32>
    %71 = vector.shape_cast %70 : vector<1x128x128xf32> to vector<128x128xf32>
    %c1_65 = arith.constant 1 : index
    %c0_66 = arith.constant 0 : index
    %c0_67 = arith.constant 0 : index
    %72 = vector.load %arg9[%c1_65, %c0_66, %c0_67] : memref<3x1x128xf32, #tpu.memory_space<vmem>>, vector<1x1x128xf32>
    %73 = vector.shape_cast %72 : vector<1x1x128xf32> to vector<1x128xf32>
    %cst_68 = arith.constant dense<0.000000e+00> : vector<8x128xf32>
    %74 = tpu.matmul %69, %71, %cst_68 {dimension_numbers = #tpu.dot_dimension_numbers<[1], [0], [0], [1], [0, 0, 1, 1], [], []>} : vector<8x128xf32>, vector<128x128xf32>, vector<8x128xf32> -> vector<8x128xf32>
    %75 = vector.broadcast %73 : vector<1x128xf32> to vector<8x128xf32>
    %76 = arith.addf %74, %75 : vector<8x128xf32>
    %c1_69 = arith.constant 1 : index
    %c0_70 = arith.constant 0 : index
    %c0_71 = arith.constant 0 : index
    %77 = vector.load %arg20[%c1_69, %c0_70, %c0_71] : memref<3x8x128xf32, #tpu.memory_space<vmem>>, vector<1x8x128xf32>
    %78 = vector.shape_cast %77 : vector<1x8x128xf32> to vector<8x128xf32>
    %79 = vector.shape_cast %76 : vector<8x128xf32> to vector<1x8x128xf32>
    tpu.vector_store %arg20[%c1_69, %c0_70, %c0_71], %79 {strides = array<i32>} : memref<3x8x128xf32, #tpu.memory_space<vmem>>, vector<1x8x128xf32>,
    %c1_72 = arith.constant 1 : index
    %c0_73 = arith.constant 0 : index
    %c0_74 = arith.constant 0 : index
    %80 = vector.load %arg10[%c1_72, %c0_73, %c0_74] : memref<3x128x128xf32, #tpu.memory_space<vmem>>, vector<1x128x128xf32>
    %81 = vector.shape_cast %80 : vector<1x128x128xf32> to vector<128x128xf32>
    %cst_75 = arith.constant dense<0.000000e+00> : vector<8x128xf32>
    %82 = tpu.matmul %76, %81, %cst_75 {dimension_numbers = #tpu.dot_dimension_numbers<[1], [0], [0], [1], [0, 0, 1, 1], [], []>} : vector<8x128xf32>, vector<128x128xf32>, vector<8x128xf32> -> vector<8x128xf32>
    %83 = arith.addf %42, %82 : vector<8x128xf32>
    %c2 = arith.constant 2 : index
    %c0_76 = arith.constant 0 : index
    %c0_77 = arith.constant 0 : index
    %84 = vector.load %arg2[%c2, %c0_76, %c0_77] : memref<3x128x128xf32, #tpu.memory_space<vmem>>, vector<1x128x128xf32>
    %85 = vector.shape_cast %84 : vector<1x128x128xf32> to vector<128x128xf32>
    %c2_78 = arith.constant 2 : index
    %c0_79 = arith.constant 0 : index
    %c0_80 = arith.constant 0 : index
    %86 = vector.load %arg3[%c2_78, %c0_79, %c0_80] : memref<3x1x128xf32, #tpu.memory_space<vmem>>, vector<1x1x128xf32>
    %87 = vector.shape_cast %86 : vector<1x1x128xf32> to vector<1x128xf32>
    %cst_81 = arith.constant dense<0.000000e+00> : vector<8x128xf32>
    %88 = tpu.matmul %0, %85, %cst_81 {dimension_numbers = #tpu.dot_dimension_numbers<[1], [0], [0], [1], [0, 0, 1, 1], [], []>} : vector<8x128xf32>, vector<128x128xf32>, vector<8x128xf32> -> vector<8x128xf32>
    %89 = vector.broadcast %87 : vector<1x128xf32> to vector<8x128xf32>
    %90 = arith.addf %88, %89 : vector<8x128xf32>
    %cst_82 = arith.constant 0.000000e+00 : f32
    %91 = vector.broadcast %cst_82 : f32 to vector<8x128xf32>
    %92 = arith.maximumf %90, %91 : vector<8x128xf32>
    %c2_83 = arith.constant 2 : index
    %c0_84 = arith.constant 0 : index
    %c0_85 = arith.constant 0 : index
    %93 = vector.load %arg4[%c2_83, %c0_84, %c0_85] : memref<3x128x128xf32, #tpu.memory_space<vmem>>, vector<1x128x128xf32>
    %94 = vector.shape_cast %93 : vector<1x128x128xf32> to vector<128x128xf32>
    %c2_86 = arith.constant 2 : index
    %c0_87 = arith.constant 0 : index
    %c0_88 = arith.constant 0 : index
    %95 = vector.load %arg5[%c2_86, %c0_87, %c0_88] : memref<3x1x128xf32, #tpu.memory_space<vmem>>, vector<1x1x128xf32>
    %96 = vector.shape_cast %95 : vector<1x1x128xf32> to vector<1x128xf32>
    %cst_89 = arith.constant dense<0.000000e+00> : vector<8x128xf32>
    %97 = tpu.matmul %92, %94, %cst_89 {dimension_numbers = #tpu.dot_dimension_numbers<[1], [0], [0], [1], [0, 0, 1, 1], [], []>} : vector<8x128xf32>, vector<128x128xf32>, vector<8x128xf32> -> vector<8x128xf32>
    %98 = vector.broadcast %96 : vector<1x128xf32> to vector<8x128xf32>
    %99 = arith.addf %97, %98 : vector<8x128xf32>
    %cst_90 = arith.constant 0.000000e+00 : f32
    %100 = vector.broadcast %cst_90 : f32 to vector<8x128xf32>
    %101 = arith.maximumf %99, %100 : vector<8x128xf32>
    %c2_91 = arith.constant 2 : index
    %c0_92 = arith.constant 0 : index
    %c0_93 = arith.constant 0 : index
    %102 = vector.load %arg6[%c2_91, %c0_92, %c0_93] : memref<3x128x128xf32, #tpu.memory_space<vmem>>, vector<1x128x128xf32>
    %103 = vector.shape_cast %102 : vector<1x128x128xf32> to vector<128x128xf32>
    %c2_94 = arith.constant 2 : index
    %c0_95 = arith.constant 0 : index
    %c0_96 = arith.constant 0 : index
    %104 = vector.load %arg7[%c2_94, %c0_95, %c0_96] : memref<3x1x128xf32, #tpu.memory_space<vmem>>, vector<1x1x128xf32>
    %105 = vector.shape_cast %104 : vector<1x1x128xf32> to vector<1x128xf32>
    %cst_97 = arith.constant dense<0.000000e+00> : vector<8x128xf32>
    %106 = tpu.matmul %101, %103, %cst_97 {dimension_numbers = #tpu.dot_dimension_numbers<[1], [0], [0], [1], [0, 0, 1, 1], [], []>} : vector<8x128xf32>, vector<128x128xf32>, vector<8x128xf32> -> vector<8x128xf32>
    %107 = vector.broadcast %105 : vector<1x128xf32> to vector<8x128xf32>
    %108 = arith.addf %106, %107 : vector<8x128xf32>
    %cst_98 = arith.constant 0.000000e+00 : f32
    %109 = vector.broadcast %cst_98 : f32 to vector<8x128xf32>
    %110 = arith.maximumf %108, %109 : vector<8x128xf32>
    %c2_99 = arith.constant 2 : index
    %c0_100 = arith.constant 0 : index
    %c0_101 = arith.constant 0 : index
    %111 = vector.load %arg8[%c2_99, %c0_100, %c0_101] : memref<3x128x128xf32, #tpu.memory_space<vmem>>, vector<1x128x128xf32>
    %112 = vector.shape_cast %111 : vector<1x128x128xf32> to vector<128x128xf32>
    %c2_102 = arith.constant 2 : index
    %c0_103 = arith.constant 0 : index
    %c0_104 = arith.constant 0 : index
    %113 = vector.load %arg9[%c2_102, %c0_103, %c0_104] : memref<3x1x128xf32, #tpu.memory_space<vmem>>, vector<1x1x128xf32>
    %114 = vector.shape_cast %113 : vector<1x1x128xf32> to vector<1x128xf32>
    %cst_105 = arith.constant dense<0.000000e+00> : vector<8x128xf32>
    %115 = tpu.matmul %110, %112, %cst_105 {dimension_numbers = #tpu.dot_dimension_numbers<[1], [0], [0], [1], [0, 0, 1, 1], [], []>} : vector<8x128xf32>, vector<128x128xf32>, vector<8x128xf32> -> vector<8x128xf32>
    %116 = vector.broadcast %114 : vector<1x128xf32> to vector<8x128xf32>
    %117 = arith.addf %115, %116 : vector<8x128xf32>
    %c2_106 = arith.constant 2 : index
    %c0_107 = arith.constant 0 : index
    %c0_108 = arith.constant 0 : index
    %118 = vector.load %arg20[%c2_106, %c0_107, %c0_108] : memref<3x8x128xf32, #tpu.memory_space<vmem>>, vector<1x8x128xf32>
    %119 = vector.shape_cast %118 : vector<1x8x128xf32> to vector<8x128xf32>
    %120 = vector.shape_cast %117 : vector<8x128xf32> to vector<1x8x128xf32>
    tpu.vector_store %arg20[%c2_106, %c0_107, %c0_108], %120 {strides = array<i32>} : memref<3x8x128xf32, #tpu.memory_space<vmem>>, vector<1x8x128xf32>,
    %c2_109 = arith.constant 2 : index
    %c0_110 = arith.constant 0 : index
    %c0_111 = arith.constant 0 : index
    %121 = vector.load %arg10[%c2_109, %c0_110, %c0_111] : memref<3x128x128xf32, #tpu.memory_space<vmem>>, vector<1x128x128xf32>
    %122 = vector.shape_cast %121 : vector<1x128x128xf32> to vector<128x128xf32>
    %cst_112 = arith.constant dense<0.000000e+00> : vector<8x128xf32>
    %123 = tpu.matmul %117, %122, %cst_112 {dimension_numbers = #tpu.dot_dimension_numbers<[1], [0], [0], [1], [0, 0, 1, 1], [], []>} : vector<8x128xf32>, vector<128x128xf32>, vector<8x128xf32> -> vector<8x128xf32>
    %124 = arith.addf %83, %123 : vector<8x128xf32>
    %c0_113 = arith.constant 0 : index
    %c0_114 = arith.constant 0 : index
    %125 = vector.load %arg11[%c0_113, %c0_114] : memref<1x128xf32, #tpu.memory_space<vmem>>, vector<1x128xf32>
    %126 = vector.broadcast %125 : vector<1x128xf32> to vector<8x128xf32>
    %127 = arith.addf %124, %126 : vector<8x128xf32>
    %c0_115 = arith.constant 0 : index
    %c0_116 = arith.constant 0 : index
    %128 = vector.load %arg21[%c0_115, %c0_116] : memref<8x128xf32, #tpu.memory_space<vmem>>, vector<8x128xf32>
    tpu.vector_store %arg21[%c0_115, %c0_116], %127 {strides = array<i32>} : memref<8x128xf32, #tpu.memory_space<vmem>>, vector<8x128xf32>,
    %c0_117 = arith.constant 0 : index
    %c0_118 = arith.constant 0 : index
    %129 = vector.load %arg12[%c0_117, %c0_118] : memref<128x128xf32, #tpu.memory_space<vmem>>, vector<128x128xf32>
    %c0_119 = arith.constant 0 : index
    %c0_120 = arith.constant 0 : index
    %130 = vector.load %arg13[%c0_119, %c0_120] : memref<1x128xf32, #tpu.memory_space<vmem>>, vector<1x128xf32>
    %cst_121 = arith.constant dense<0.000000e+00> : vector<8x128xf32>
    %131 = tpu.matmul %127, %129, %cst_121 {dimension_numbers = #tpu.dot_dimension_numbers<[1], [0], [0], [1], [0, 0, 1, 1], [], []>} : vector<8x128xf32>, vector<128x128xf32>, vector<8x128xf32> -> vector<8x128xf32>
    %132 = vector.broadcast %130 : vector<1x128xf32> to vector<8x128xf32>
    %133 = arith.addf %131, %132 : vector<8x128xf32>
    %cst_122 = arith.constant 0.000000e+00 : f32
    %134 = vector.broadcast %cst_122 : f32 to vector<8x128xf32>
    %135 = arith.maximumf %133, %134 : vector<8x128xf32>
    %c0_123 = arith.constant 0 : index
    %c0_124 = arith.constant 0 : index
    %136 = vector.load %arg14[%c0_123, %c0_124] : memref<128x128xf32, #tpu.memory_space<vmem>>, vector<128x128xf32>
    %c0_125 = arith.constant 0 : index
    %c0_126 = arith.constant 0 : index
    %137 = vector.load %arg15[%c0_125, %c0_126] : memref<1x128xf32, #tpu.memory_space<vmem>>, vector<1x128xf32>
    %cst_127 = arith.constant dense<0.000000e+00> : vector<8x128xf32>
    %138 = tpu.matmul %135, %136, %cst_127 {dimension_numbers = #tpu.dot_dimension_numbers<[1], [0], [0], [1], [0, 0, 1, 1], [], []>} : vector<8x128xf32>, vector<128x128xf32>, vector<8x128xf32> -> vector<8x128xf32>
    %139 = vector.broadcast %137 : vector<1x128xf32> to vector<8x128xf32>
    %140 = arith.addf %138, %139 : vector<8x128xf32>
    %cst_128 = arith.constant 0.000000e+00 : f32
    %141 = vector.broadcast %cst_128 : f32 to vector<8x128xf32>
    %142 = arith.maximumf %140, %141 : vector<8x128xf32>
    %c0_129 = arith.constant 0 : index
    %c0_130 = arith.constant 0 : index
    %143 = vector.load %arg16[%c0_129, %c0_130] : memref<128x128xf32, #tpu.memory_space<vmem>>, vector<128x128xf32>
    %c0_131 = arith.constant 0 : index
    %c0_132 = arith.constant 0 : index
    %144 = vector.load %arg17[%c0_131, %c0_132] : memref<1x128xf32, #tpu.memory_space<vmem>>, vector<1x128xf32>
    %cst_133 = arith.constant dense<0.000000e+00> : vector<8x128xf32>
    %145 = tpu.matmul %142, %143, %cst_133 {dimension_numbers = #tpu.dot_dimension_numbers<[1], [0], [0], [1], [0, 0, 1, 1], [], []>} : vector<8x128xf32>, vector<128x128xf32>, vector<8x128xf32> -> vector<8x128xf32>
    %146 = vector.broadcast %144 : vector<1x128xf32> to vector<8x128xf32>
    %147 = arith.addf %145, %146 : vector<8x128xf32>
    %cst_134 = arith.constant 0.000000e+00 : f32
    %148 = vector.broadcast %cst_134 : f32 to vector<8x128xf32>
    %149 = arith.maximumf %147, %148 : vector<8x128xf32>
    %c0_135 = arith.constant 0 : index
    %c0_136 = arith.constant 0 : index
    %150 = vector.load %arg18[%c0_135, %c0_136] : memref<128x128xf32, #tpu.memory_space<vmem>>, vector<128x128xf32>
    %c0_137 = arith.constant 0 : index
    %c0_138 = arith.constant 0 : index
    %151 = vector.load %arg19[%c0_137, %c0_138] : memref<1x128xf32, #tpu.memory_space<vmem>>, vector<1x128xf32>
    %cst_139 = arith.constant dense<0.000000e+00> : vector<8x128xf32>
    %152 = tpu.matmul %149, %150, %cst_139 {dimension_numbers = #tpu.dot_dimension_numbers<[1], [0], [0], [1], [0, 0, 1, 1], [], []>} : vector<8x128xf32>, vector<128x128xf32>, vector<8x128xf32> -> vector<8x128xf32>
    %153 = vector.broadcast %151 : vector<1x128xf32> to vector<8x128xf32>
    %154 = arith.addf %152, %153 : vector<8x128xf32>
    %c0_140 = arith.constant 0 : index
    %c0_141 = arith.constant 0 : index
    %155 = vector.load %arg22[%c0_140, %c0_141] : memref<8x128xf32, #tpu.memory_space<vmem>>, vector<8x128xf32>
    tpu.vector_store %arg22[%c0_140, %c0_141], %154 {strides = array<i32>} : memref<8x128xf32, #tpu.memory_space<vmem>>, vector<8x128xf32>,
    return
  }
  func.func @transform_0(%arg0: i32) -> (i32, i32) {
    %c0_i32 = arith.constant 0 : i32
    %c0_i32_0 = arith.constant 0 : i32
    return %arg0, %c0_i32 : i32, i32
  }
  func.func @transform_1(%arg0: i32) -> (i32, i32, i32) {
    %c0_i32 = arith.constant 0 : i32
    %c0_i32_0 = arith.constant 0 : i32
    %c0_i32_1 = arith.constant 0 : i32
    %c0_i32_2 = arith.constant 0 : i32
    return %c0_i32, %c0_i32_0, %c0_i32_1 : i32, i32, i32
  }
  func.func @transform_2(%arg0: i32) -> (i32, i32, i32) {
    %c0_i32 = arith.constant 0 : i32
    %c0_i32_0 = arith.constant 0 : i32
    %c0_i32_1 = arith.constant 0 : i32
    %c0_i32_2 = arith.constant 0 : i32
    return %c0_i32, %c0_i32_0, %c0_i32_1 : i32, i32, i32
  }
  func.func @transform_3(%arg0: i32) -> (i32, i32, i32) {
    %c0_i32 = arith.constant 0 : i32
    %c0_i32_0 = arith.constant 0 : i32
    %c0_i32_1 = arith.constant 0 : i32
    %c0_i32_2 = arith.constant 0 : i32
    return %c0_i32, %c0_i32_0, %c0_i32_1 : i32, i32, i32
  }
  func.func @transform_4(%arg0: i32) -> (i32, i32, i32) {
    %c0_i32 = arith.constant 0 : i32
    %c0_i32_0 = arith.constant 0 : i32
    %c0_i32_1 = arith.constant 0 : i32
    %c0_i32_2 = arith.constant 0 : i32
    return %c0_i32, %c0_i32_0, %c0_i32_1 : i32, i32, i32
  }
  func.func @transform_5(%arg0: i32) -> (i32, i32, i32) {
    %c0_i32 = arith.constant 0 : i32
    %c0_i32_0 = arith.constant 0 : i32
    %c0_i32_1 = arith.constant 0 : i32
    %c0_i32_2 = arith.constant 0 : i32
    return %c0_i32, %c0_i32_0, %c0_i32_1 : i32, i32, i32
  }
  func.func @transform_6(%arg0: i32) -> (i32, i32, i32) {
    %c0_i32 = arith.constant 0 : i32
    %c0_i32_0 = arith.constant 0 : i32
    %c0_i32_1 = arith.constant 0 : i32
    %c0_i32_2 = arith.constant 0 : i32
    return %c0_i32, %c0_i32_0, %c0_i32_1 : i32, i32, i32
  }
  func.func @transform_7(%arg0: i32) -> (i32, i32, i32) {
    %c0_i32 = arith.constant 0 : i32
    %c0_i32_0 = arith.constant 0 : i32
    %c0_i32_1 = arith.constant 0 : i32
    %c0_i32_2 = arith.constant 0 : i32
    return %c0_i32, %c0_i32_0, %c0_i32_1 : i32, i32, i32
  }
  func.func @transform_8(%arg0: i32) -> (i32, i32, i32) {
    %c0_i32 = arith.constant 0 : i32
    %c0_i32_0 = arith.constant 0 : i32
    %c0_i32_1 = arith.constant 0 : i32
    %c0_i32_2 = arith.constant 0 : i32
    return %c0_i32, %c0_i32_0, %c0_i32_1 : i32, i32, i32
  }
  func.func @transform_9(%arg0: i32) -> (i32, i32, i32) {
    %c0_i32 = arith.constant 0 : i32
    %c0_i32_0 = arith.constant 0 : i32
    %c0_i32_1 = arith.constant 0 : i32
    %c0_i32_2 = arith.constant 0 : i32
    return %c0_i32, %c0_i32_0, %c0_i32_1 : i32, i32, i32
  }
  func.func @transform_10(%arg0: i32) -> (i32, i32) {
    %c0_i32 = arith.constant 0 : i32
    %c0_i32_0 = arith.constant 0 : i32
    %c0_i32_1 = arith.constant 0 : i32
    return %c0_i32, %c0_i32_0 : i32, i32
  }
  func.func @transform_11(%arg0: i32) -> (i32, i32) {
    %c0_i32 = arith.constant 0 : i32
    %c0_i32_0 = arith.constant 0 : i32
    %c0_i32_1 = arith.constant 0 : i32
    return %c0_i32, %c0_i32_0 : i32, i32
  }
  func.func @transform_12(%arg0: i32) -> (i32, i32) {
    %c0_i32 = arith.constant 0 : i32
    %c0_i32_0 = arith.constant 0 : i32
    %c0_i32_1 = arith.constant 0 : i32
    return %c0_i32, %c0_i32_0 : i32, i32
  }
  func.func @transform_13(%arg0: i32) -> (i32, i32) {
    %c0_i32 = arith.constant 0 : i32
    %c0_i32_0 = arith.constant 0 : i32
    %c0_i32_1 = arith.constant 0 : i32
    return %c0_i32, %c0_i32_0 : i32, i32
  }
  func.func @transform_14(%arg0: i32) -> (i32, i32) {
    %c0_i32 = arith.constant 0 : i32
    %c0_i32_0 = arith.constant 0 : i32
    %c0_i32_1 = arith.constant 0 : i32
    return %c0_i32, %c0_i32_0 : i32, i32
  }
  func.func @transform_15(%arg0: i32) -> (i32, i32) {
    %c0_i32 = arith.constant 0 : i32
    %c0_i32_0 = arith.constant 0 : i32
    %c0_i32_1 = arith.constant 0 : i32
    return %c0_i32, %c0_i32_0 : i32, i32
  }
  func.func @transform_16(%arg0: i32) -> (i32, i32) {
    %c0_i32 = arith.constant 0 : i32
    %c0_i32_0 = arith.constant 0 : i32
    %c0_i32_1 = arith.constant 0 : i32
    return %c0_i32, %c0_i32_0 : i32, i32
  }
  func.func @transform_17(%arg0: i32) -> (i32, i32) {
    %c0_i32 = arith.constant 0 : i32
    %c0_i32_0 = arith.constant 0 : i32
    %c0_i32_1 = arith.constant 0 : i32
    return %c0_i32, %c0_i32_0 : i32, i32
  }
  func.func @transform_18(%arg0: i32) -> (i32, i32) {
    %c0_i32 = arith.constant 0 : i32
    %c0_i32_0 = arith.constant 0 : i32
    %c0_i32_1 = arith.constant 0 : i32
    return %c0_i32, %c0_i32_0 : i32, i32
  }
  func.func @transform_19(%arg0: i32) -> (i32, i32, i32) {
    %c0_i32 = arith.constant 0 : i32
    %c0_i32_0 = arith.constant 0 : i32
    %c0_i32_1 = arith.constant 0 : i32
    return %c0_i32, %arg0, %c0_i32_0 : i32, i32, i32
  }
  func.func @transform_20(%arg0: i32) -> (i32, i32) {
    %c0_i32 = arith.constant 0 : i32
    %c0_i32_0 = arith.constant 0 : i32
    return %arg0, %c0_i32 : i32, i32
  }
  func.func @transform_21(%arg0: i32) -> (i32, i32) {
    %c0_i32 = arith.constant 0 : i32
    %c0_i32_0 = arith.constant 0 : i32
    return %arg0, %c0_i32 : i32, i32
  }
}

</mosaic_0001>

<llo_original>
// kernel: imae_forward.1
$region0: #{imae_forward.1}
  #allocation0 [shape = 'u32[]', space=smem, size = 0x4, offset = 0x4, fixed_abs, tag = 'smem constant byte address 0x4 - core index']
  #allocation1 [shape = 'u32[144,128]{1,0:T(1,128)}', space=vmem, size = 0x12000, scoped, tag = 'internal scratch']
  %s0 = inlined_call_operand.vmem [shape: f32[8,128], index: 0, kind: input, shape index: {}]
  %s1 = inlined_call_operand.vmem [shape: f32[3,128,128], index: 1, kind: input, shape index: {}]
  %s2 = inlined_call_operand.vmem [shape: f32[3,1,128], index: 2, kind: input, shape index: {}]
  %s3 = inlined_call_operand.vmem [shape: f32[3,128,128], index: 3, kind: input, shape index: {}]
  %s4 = inlined_call_operand.vmem [shape: f32[3,1,128], index: 4, kind: input, shape index: {}]
  %s5 = inlined_call_operand.vmem [shape: f32[3,128,128], index: 5, kind: input, shape index: {}]
  %s6 = inlined_call_operand.vmem [shape: f32[3,1,128], index: 6, kind: input, shape index: {}]
  %s7 = inlined_call_operand.vmem [shape: f32[3,128,128], index: 7, kind: input, shape index: {}]
  %s8 = inlined_call_operand.vmem [shape: f32[3,1,128], index: 8, kind: input, shape index: {}]
  %s9 = inlined_call_operand.vmem [shape: f32[3,128,128], index: 9, kind: input, shape index: {}]
  %s10 = inlined_call_operand.vmem [shape: f32[1,128], index: 10, kind: input, shape index: {}]
  %s11 = inlined_call_operand.vmem [shape: f32[128,128], index: 11, kind: input, shape index: {}]
  %s12 = inlined_call_operand.vmem [shape: f32[1,128], index: 12, kind: input, shape index: {}]
  %s13 = inlined_call_operand.vmem [shape: f32[128,128], index: 13, kind: input, shape index: {}]
  %s14 = inlined_call_operand.vmem [shape: f32[1,128], index: 14, kind: input, shape index: {}]
  %s15 = inlined_call_operand.vmem [shape: f32[128,128], index: 15, kind: input, shape index: {}]
  %s16 = inlined_call_operand.vmem [shape: f32[1,128], index: 16, kind: input, shape index: {}]
  %s17 = inlined_call_operand.vmem [shape: f32[128,128], index: 17, kind: input, shape index: {}]
  %s18 = inlined_call_operand.vmem [shape: f32[1,128], index: 18, kind: input, shape index: {}]
  %s19 = inlined_call_operand.hbm [shape: f32[3,8,128], index: 19, kind: output, shape index: {0}]
  %s20 = inlined_call_operand.hbm [shape: f32[8,128], index: 20, kind: output, shape index: {1}]
  %s21 = inlined_call_operand.hbm [shape: f32[8,128], index: 21, kind: output, shape index: {2}]
  %22 = xla_tuple %s19, %s20, %s21
  %s23 = sld [smem:[#allocation0]]
  $region102: #{imae_forward.1} parent=0
    _
  %s25 = ssub.s32 1, %s23
  %s26 = scalar_select 0, %s25, %s23
  $region1: #{imae_forward.1} parent=0
    #allocation2 [shape = 'u8[12288]{0}', space=vmem, size = 0x3000, scoped, tag = 'output window, operand 0, single buffered']
    #allocation3 [shape = 's32[1]{0}', space=sflag, size = 0x4, scoped, tag = 'scoped memory for imae_forward.1']
    #allocation4 [shape = 'u8[4096]{0}', space=vmem, size = 0x1000, scoped, tag = 'output window, operand 1, single buffered']
    #allocation5 [shape = 's32[1]{0}', space=sflag, size = 0x4, scoped, tag = 'scoped memory for imae_forward.1']
    #allocation6 [shape = 'u8[4096]{0}', space=vmem, size = 0x1000, scoped, tag = 'output window, operand 2, single buffered']
    %27 = vsyncpa [#allocation3], 0
    %28 = vsyncpa [#allocation5], 0
    // Predicated region
    $region2: #{imae_forward.1} parent=1 // pred_check
      _
    $region3: #{imae_forward.1} parent=1 // pred_check_branch
      %30 = sbr.rel (0) target = $region5
    $region4: #{imae_forward.1} parent=1 // pred_region
      _
    $region5: #{imae_forward.1} parent=1 // pred_fallthru
      _
    // Predicated region
    $region6: #{imae_forward.1} parent=1 // pred_check
      _
    $region7: #{imae_forward.1} parent=1 // pred_check_branch
      %32 = sbr.rel (0) target = $region9
    $region8: #{imae_forward.1} parent=1 // pred_region
      _
    $region9: #{imae_forward.1} parent=1 // pred_fallthru
      _
    // Predicated region
    $region10: #{imae_forward.1} parent=1 // pred_check
      _
    $region11: #{imae_forward.1} parent=1 // pred_check_branch
      %34 = sbr.rel (0) target = $region13
    $region12: #{imae_forward.1} parent=1 // pred_region
      _
    $region13: #{imae_forward.1} parent=1 // pred_fallthru
      _
    // Predicated region
    $region14: #{imae_forward.1} parent=1 // pred_check
      _
    $region15: #{imae_forward.1} parent=1 // pred_check_branch
      %36 = sbr.rel (0) target = $region17
    $region16: #{imae_forward.1} parent=1 // pred_region
      _
    $region17: #{imae_forward.1} parent=1 // pred_fallthru
      _
    // Predicated region
    $region18: #{imae_forward.1} parent=1 // pred_check
      _
    $region19: #{imae_forward.1} parent=1 // pred_check_branch
      %38 = sbr.rel (0) target = $region21
    $region20: #{imae_forward.1} parent=1 // pred_region
      _
    $region21: #{imae_forward.1} parent=1 // pred_fallthru
      _
    // Predicated region
    $region22: #{imae_forward.1} parent=1 // pred_check
      _
    $region23: #{imae_forward.1} parent=1 // pred_check_branch
      %40 = sbr.rel (0) target = $region25
    $region24: #{imae_forward.1} parent=1 // pred_region
      _
    $region25: #{imae_forward.1} parent=1 // pred_fallthru
      _
    // Predicated region
    $region26: #{imae_forward.1} parent=1 // pred_check
      _
    $region27: #{imae_forward.1} parent=1 // pred_check_branch
      %42 = sbr.rel (0) target = $region29
    $region28: #{imae_forward.1} parent=1 // pred_region
      _
    $region29: #{imae_forward.1} parent=1 // pred_fallthru
      _
    // Predicated region
    $region30: #{imae_forward.1} parent=1 // pred_check
      _
    $region31: #{imae_forward.1} parent=1 // pred_check_branch
      %44 = sbr.rel (0) target = $region33
    $region32: #{imae_forward.1} parent=1 // pred_region
      _
    $region33: #{imae_forward.1} parent=1 // pred_fallthru
      _
    // Predicated region
    $region34: #{imae_forward.1} parent=1 // pred_check
      _
    $region35: #{imae_forward.1} parent=1 // pred_check_branch
      %46 = sbr.rel (0) target = $region37
    $region36: #{imae_forward.1} parent=1 // pred_region
      _
    $region37: #{imae_forward.1} parent=1 // pred_fallthru
      _
    // Predicated region
    $region38: #{imae_forward.1} parent=1 // pred_check
      _
    $region39: #{imae_forward.1} parent=1 // pred_check_branch
      %48 = sbr.rel (0) target = $region41
    $region40: #{imae_forward.1} parent=1 // pred_region
      _
    $region41: #{imae_forward.1} parent=1 // pred_fallthru
      _
    // Predicated region
    $region42: #{imae_forward.1} parent=1 // pred_check
      _
    $region43: #{imae_forward.1} parent=1 // pred_check_branch
      %50 = sbr.rel (0) target = $region45
    $region44: #{imae_forward.1} parent=1 // pred_region
      _
    $region45: #{imae_forward.1} parent=1 // pred_fallthru
      _
    // Predicated region
    $region46: #{imae_forward.1} parent=1 // pred_check
      _
    $region47: #{imae_forward.1} parent=1 // pred_check_branch
      %52 = sbr.rel (0) target = $region49
    $region48: #{imae_forward.1} parent=1 // pred_region
      _
    $region49: #{imae_forward.1} parent=1 // pred_fallthru
      _
    // Predicated region
    $region50: #{imae_forward.1} parent=1 // pred_check
      _
    $region51: #{imae_forward.1} parent=1 // pred_check_branch
      %54 = sbr.rel (0) target = $region53
    $region52: #{imae_forward.1} parent=1 // pred_region
      _
    $region53: #{imae_forward.1} parent=1 // pred_fallthru
      _
    // Predicated region
    $region54: #{imae_forward.1} parent=1 // pred_check
      _
    $region55: #{imae_forward.1} parent=1 // pred_check_branch
      %56 = sbr.rel (0) target = $region57
    $region56: #{imae_forward.1} parent=1 // pred_region
      _
    $region57: #{imae_forward.1} parent=1 // pred_fallthru
      _
    // Predicated region
    $region58: #{imae_forward.1} parent=1 // pred_check
      _
    $region59: #{imae_forward.1} parent=1 // pred_check_branch
      %58 = sbr.rel (0) target = $region61
    $region60: #{imae_forward.1} parent=1 // pred_region
      _
    $region61: #{imae_forward.1} parent=1 // pred_fallthru
      _
    // Predicated region
    $region62: #{imae_forward.1} parent=1 // pred_check
      _
    $region63: #{imae_forward.1} parent=1 // pred_check_branch
      %60 = sbr.rel (0) target = $region65
    $region64: #{imae_forward.1} parent=1 // pred_region
      _
    $region65: #{imae_forward.1} parent=1 // pred_fallthru
      _
    // Predicated region
    $region66: #{imae_forward.1} parent=1 // pred_check
      _
    $region67: #{imae_forward.1} parent=1 // pred_check_branch
      %62 = sbr.rel (0) target = $region69
    $region68: #{imae_forward.1} parent=1 // pred_region
      _
    $region69: #{imae_forward.1} parent=1 // pred_fallthru
      _
    // Predicated region
    $region70: #{imae_forward.1} parent=1 // pred_check
      _
    $region71: #{imae_forward.1} parent=1 // pred_check_branch
      %64 = sbr.rel (0) target = $region73
    $region72: #{imae_forward.1} parent=1 // pred_region
      _
    $region73: #{imae_forward.1} parent=1 // pred_fallthru
      _
    // Predicated region
    $region74: #{imae_forward.1} parent=1 // pred_check
      _
    $region75: #{imae_forward.1} parent=1 // pred_check_branch
      %66 = sbr.rel (0) target = $region77
    $region76: #{imae_forward.1} parent=1 // pred_region
      _
    $region77: #{imae_forward.1} parent=1 // pred_fallthru
      _
    %v67 = vld [vmem:[%s0] sm:$0xff]
    %v68 = vld [vmem:[%s1] sm:$0xff]
    %v69 = vld [vmem:[%s1 + $0x8] sm:$0xff]
    %v70 = vld [vmem:[%s1 + $0x10] sm:$0xff]
    %v71 = vld [vmem:[%s1 + $0x18] sm:$0xff]
    %v72 = vld [vmem:[%s1 + $0x20] sm:$0xff]
    %v73 = vld [vmem:[%s1 + $0x28] sm:$0xff]
    %v74 = vld [vmem:[%s1 + $0x30] sm:$0xff]
    %v75 = vld [vmem:[%s1 + $0x38] sm:$0xff]
    %v76 = vld [vmem:[%s1 + $0x40] sm:$0xff]
    %v77 = vld [vmem:[%s1 + $0x48] sm:$0xff]
    %v78 = vld [vmem:[%s1 + $0x50] sm:$0xff]
    %v79 = vld [vmem:[%s1 + $0x58] sm:$0xff]
    %v80 = vld [vmem:[%s1 + $0x60] sm:$0xff]
    %v81 = vld [vmem:[%s1 + $0x68] sm:$0xff]
    %v82 = vld [vmem:[%s1 + $0x70] sm:$0xff]
    %v83 = vld [vmem:[%s1 + $0x78] sm:$0xff]
    %v84 = vld [vmem:[%s2] sm:$0x1]
    %v86 = vlaneseq
    %v87 = vshrl.u32 %v86, 7
    %v88 = vsub.s32 0, %v87
    %v89 = vrot.slane %v84, %v88
    %91 = vmatprep.subr.mxu0 0.0
    %92 = vmatpush1.msra.mxu0 %v68
    %93 = vmatprep.subr.mxu0 0.0
    %94 = vmatpush1.msra.mxu0 %v69
    %95 = vmatprep.subr.mxu0 0.0
    %96 = vmatpush1.msra.mxu0 %v70
    %97 = vmatprep.subr.mxu0 0.0
    %98 = vmatpush1.msra.mxu0 %v71
    %99 = vmatprep.subr.mxu0 0.0
    %100 = vmatpush1.msra.mxu0 %v72
    %101 = vmatprep.subr.mxu0 0.0
    %102 = vmatpush1.msra.mxu0 %v73
    %103 = vmatprep.subr.mxu0 0.0
    %104 = vmatpush1.msra.mxu0 %v74
    %105 = vmatprep.subr.mxu0 0.0
    %106 = vmatpush1.msra.mxu0 %v75
    %107 = vmatprep.subr.mxu0 0.0
    %108 = vmatpush1.msra.mxu0 %v76
    %109 = vmatprep.subr.mxu0 0.0
    %110 = vmatpush1.msra.mxu0 %v77
    %111 = vmatprep.subr.mxu0 0.0
    %112 = vmatpush1.msra.mxu0 %v78
    %113 = vmatprep.subr.mxu0 0.0
    %114 = vmatpush1.msra.mxu0 %v79
    %115 = vmatprep.subr.mxu0 0.0
    %116 = vmatpush1.msra.mxu0 %v80
    %117 = vmatprep.subr.mxu0 0.0
    %118 = vmatpush1.msra.mxu0 %v81
    %119 = vmatprep.subr.mxu0 0.0
    %120 = vmatpush1.msra.mxu0 %v82
    %121 = vmatprep.subr.mxu0 0.0
    %122 = vmatpush1.msra.mxu0 %v83
    %123 = vmatprep.subr.mxu0 0.0
    %124 = vmatpush1.msra.mxu0 0.0
    %125 = vmatprep.subr.mxu0 0.0
    %126 = vmatpush1.msra.mxu0 0.0
    %127 = vmatprep.subr.mxu0 0.0
    %128 = vmatpush1.msra.mxu0 0.0
    %129 = vmatprep.subr.mxu0 0.0
    %130 = vmatpush1.msra.mxu0 0.0
    %131 = vmatprep.subr.mxu0 0.0
    %132 = vmatpush1.msra.mxu0 0.0
    %133 = vmatprep.subr.mxu0 0.0
    %134 = vmatpush1.msra.mxu0 0.0
    %135 = vmatprep.subr.mxu0 0.0
    %136 = vmatpush1.msra.mxu0 0.0
    %137 = vmatprep.subr.mxu0 0.0
    %138 = vmatpush1.msra.mxu0 0.0
    %139 = vmatprep.subr.mxu0 0.0
    %140 = vmatpush1.msra.mxu0 0.0
    %141 = vmatprep.subr.mxu0 0.0
    %142 = vmatpush1.msra.mxu0 0.0
    %143 = vmatprep.subr.mxu0 0.0
    %144 = vmatpush1.msra.mxu0 0.0
    %145 = vmatprep.subr.mxu0 0.0
    %146 = vmatpush1.msra.mxu0 0.0
    %147 = vmatprep.subr.mxu0 0.0
    %148 = vmatpush1.msra.mxu0 0.0
    %149 = vmatprep.subr.mxu0 0.0
    %150 = vmatpush1.msra.mxu0 0.0
    %151 = vmatprep.subr.mxu0 0.0
    %152 = vmatpush1.msra.mxu0 0.0
    %153 = vmatprep.subr.mxu0 0.0
    %154 = vmatpush1.msra.mxu0 0.0
    %155 = vmatprep.mubr.f32.mxu0 0.0
    %156 = vmatmul.mubr.f32.gmra.mrb[0].mxu0 %v67
    %v157 = vpop.f32.mrb[0].mxu0
    %v158 = vadd.f32 %v89, %v157
    %v159 = vpop.f32.mrb[0].mxu0
    %160 = vdwg.mxu0
    %v161 = vmax.f32 %v158, 0.0
    %v162 = vld [vmem:[%s3] sm:$0xff]
    %v163 = vld [vmem:[%s3 + $0x8] sm:$0xff]
    %v164 = vld [vmem:[%s3 + $0x10] sm:$0xff]
    %v165 = vld [vmem:[%s3 + $0x18] sm:$0xff]
    %v166 = vld [vmem:[%s3 + $0x20] sm:$0xff]
    %v167 = vld [vmem:[%s3 + $0x28] sm:$0xff]
    %v168 = vld [vmem:[%s3 + $0x30] sm:$0xff]
    %v169 = vld [vmem:[%s3 + $0x38] sm:$0xff]
    %v170 = vld [vmem:[%s3 + $0x40] sm:$0xff]
    %v171 = vld [vmem:[%s3 + $0x48] sm:$0xff]
    %v172 = vld [vmem:[%s3 + $0x50] sm:$0xff]
    %v173 = vld [vmem:[%s3 + $0x58] sm:$0xff]
    %v174 = vld [vmem:[%s3 + $0x60] sm:$0xff]
    %v175 = vld [vmem:[%s3 + $0x68] sm:$0xff]
    %v176 = vld [vmem:[%s3 + $0x70] sm:$0xff]
    %v177 = vld [vmem:[%s3 + $0x78] sm:$0xff]
    %v178 = vld [vmem:[%s4] sm:$0x1]
    %v180 = vlaneseq
    %v181 = vshrl.u32 %v180, 7
    %v182 = vsub.s32 0, %v181
    %v183 = vrot.slane %v178, %v182
    %185 = vmatprep.subr.mxu0 0.0
    %186 = vmatpush1.msra.mxu0 %v162
    %187 = vmatprep.subr.mxu0 0.0
    %188 = vmatpush1.msra.mxu0 %v163
    %189 = vmatprep.subr.mxu0 0.0
    %190 = vmatpush1.msra.mxu0 %v164
    %191 = vmatprep.subr.mxu0 0.0
    %192 = vmatpush1.msra.mxu0 %v165
    %193 = vmatprep.subr.mxu0 0.0
    %194 = vmatpush1.msra.mxu0 %v166
    %195 = vmatprep.subr.mxu0 0.0
    %196 = vmatpush1.msra.mxu0 %v167
    %197 = vmatprep.subr.mxu0 0.0
    %198 = vmatpush1.msra.mxu0 %v168
    %199 = vmatprep.subr.mxu0 0.0
    %200 = vmatpush1.msra.mxu0 %v169
    %201 = vmatprep.subr.mxu0 0.0
    %202 = vmatpush1.msra.mxu0 %v170
    %203 = vmatprep.subr.mxu0 0.0
    %204 = vmatpush1.msra.mxu0 %v171
    %205 = vmatprep.subr.mxu0 0.0
    %206 = vmatpush1.msra.mxu0 %v172
    %207 = vmatprep.subr.mxu0 0.0
    %208 = vmatpush1.msra.mxu0 %v173
    %209 = vmatprep.subr.mxu0 0.0
    %210 = vmatpush1.msra.mxu0 %v174
    %211 = vmatprep.subr.mxu0 0.0
    %212 = vmatpush1.msra.mxu0 %v175
    %213 = vmatprep.subr.mxu0 0.0
    %214 = vmatpush1.msra.mxu0 %v176
    %215 = vmatprep.subr.mxu0 0.0
    %216 = vmatpush1.msra.mxu0 %v177
    %217 = vmatprep.subr.mxu0 0.0
    %218 = vmatpush1.msra.mxu0 0.0
    %219 = vmatprep.subr.mxu0 0.0
    %220 = vmatpush1.msra.mxu0 0.0
    %221 = vmatprep.subr.mxu0 0.0
    %222 = vmatpush1.msra.mxu0 0.0
    %223 = vmatprep.subr.mxu0 0.0
    %224 = vmatpush1.msra.mxu0 0.0
    %225 = vmatprep.subr.mxu0 0.0
    %226 = vmatpush1.msra.mxu0 0.0
    %227 = vmatprep.subr.mxu0 0.0
    %228 = vmatpush1.msra.mxu0 0.0
    %229 = vmatprep.subr.mxu0 0.0
    %230 = vmatpush1.msra.mxu0 0.0
    %231 = vmatprep.subr.mxu0 0.0
    %232 = vmatpush1.msra.mxu0 0.0
    %233 = vmatprep.subr.mxu0 0.0
    %234 = vmatpush1.msra.mxu0 0.0
    %235 = vmatprep.subr.mxu0 0.0
    %236 = vmatpush1.msra.mxu0 0.0
    %237 = vmatprep.subr.mxu0 0.0
    %238 = vmatpush1.msra.mxu0 0.0
    %239 = vmatprep.subr.mxu0 0.0
    %240 = vmatpush1.msra.mxu0 0.0
    %241 = vmatprep.subr.mxu0 0.0
    %242 = vmatpush1.msra.mxu0 0.0
    %243 = vmatprep.subr.mxu0 0.0
    %244 = vmatpush1.msra.mxu0 0.0
    %245 = vmatprep.subr.mxu0 0.0
    %246 = vmatpush1.msra.mxu0 0.0
    %247 = vmatprep.subr.mxu0 0.0
    %248 = vmatpush1.msra.mxu0 0.0
    %249 = vmatprep.mubr.f32.mxu0 0.0
    %250 = vmatmul.mubr.f32.gmra.mrb[0].mxu0 %v161
    %v251 = vpop.f32.mrb[0].mxu0
    %v252 = vadd.f32 %v183, %v251
    %v253 = vpop.f32.mrb[0].mxu0
    %254 = vdwg.mxu0
    %v255 = vmax.f32 %v252, 0.0
    %v256 = vld [vmem:[%s5] sm:$0xff]
    %v257 = vld [vmem:[%s5 + $0x8] sm:$0xff]
    %v258 = vld [vmem:[%s5 + $0x10] sm:$0xff]
    %v259 = vld [vmem:[%s5 + $0x18] sm:$0xff]
    %v260 = vld [vmem:[%s5 + $0x20] sm:$0xff]
    %v261 = vld [vmem:[%s5 + $0x28] sm:$0xff]
    %v262 = vld [vmem:[%s5 + $0x30] sm:$0xff]
    %v263 = vld [vmem:[%s5 + $0x38] sm:$0xff]
    %v264 = vld [vmem:[%s5 + $0x40] sm:$0xff]
    %v265 = vld [vmem:[%s5 + $0x48] sm:$0xff]
    %v266 = vld [vmem:[%s5 + $0x50] sm:$0xff]
    %v267 = vld [vmem:[%s5 + $0x58] sm:$0xff]
    %v268 = vld [vmem:[%s5 + $0x60] sm:$0xff]
    %v269 = vld [vmem:[%s5 + $0x68] sm:$0xff]
    %v270 = vld [vmem:[%s5 + $0x70] sm:$0xff]
    %v271 = vld [vmem:[%s5 + $0x78] sm:$0xff]
    %v272 = vld [vmem:[%s6] sm:$0x1]
    %v274 = vlaneseq
    %v275 = vshrl.u32 %v274, 7
    %v276 = vsub.s32 0, %v275
    %v277 = vrot.slane %v272, %v276
    %279 = vmatprep.subr.mxu0 0.0
    %280 = vmatpush1.msra.mxu0 %v256
    %281 = vmatprep.subr.mxu0 0.0
    %282 = vmatpush1.msra.mxu0 %v257
    %283 = vmatprep.subr.mxu0 0.0
    %284 = vmatpush1.msra.mxu0 %v258
    %285 = vmatprep.subr.mxu0 0.0
    %286 = vmatpush1.msra.mxu0 %v259
    %287 = vmatprep.subr.mxu0 0.0
    %288 = vmatpush1.msra.mxu0 %v260
    %289 = vmatprep.subr.mxu0 0.0
    %290 = vmatpush1.msra.mxu0 %v261
    %291 = vmatprep.subr.mxu0 0.0
    %292 = vmatpush1.msra.mxu0 %v262
    %293 = vmatprep.subr.mxu0 0.0
    %294 = vmatpush1.msra.mxu0 %v263
    %295 = vmatprep.subr.mxu0 0.0
    %296 = vmatpush1.msra.mxu0 %v264
    %297 = vmatprep.subr.mxu0 0.0
    %298 = vmatpush1.msra.mxu0 %v265
    %299 = vmatprep.subr.mxu0 0.0
    %300 = vmatpush1.msra.mxu0 %v266
    %301 = vmatprep.subr.mxu0 0.0
    %302 = vmatpush1.msra.mxu0 %v267
    %303 = vmatprep.subr.mxu0 0.0
    %304 = vmatpush1.msra.mxu0 %v268
    %305 = vmatprep.subr.mxu0 0.0
    %306 = vmatpush1.msra.mxu0 %v269
    %307 = vmatprep.subr.mxu0 0.0
    %308 = vmatpush1.msra.mxu0 %v270
    %309 = vmatprep.subr.mxu0 0.0
    %310 = vmatpush1.msra.mxu0 %v271
    %311 = vmatprep.subr.mxu0 0.0
    %312 = vmatpush1.msra.mxu0 0.0
    %313 = vmatprep.subr.mxu0 0.0
    %314 = vmatpush1.msra.mxu0 0.0
    %315 = vmatprep.subr.mxu0 0.0
    %316 = vmatpush1.msra.mxu0 0.0
    %317 = vmatprep.subr.mxu0 0.0
    %318 = vmatpush1.msra.mxu0 0.0
    %319 = vmatprep.subr.mxu0 0.0
    %320 = vmatpush1.msra.mxu0 0.0
    %321 = vmatprep.subr.mxu0 0.0
    %322 = vmatpush1.msra.mxu0 0.0
    %323 = vmatprep.subr.mxu0 0.0
    %324 = vmatpush1.msra.mxu0 0.0
    %325 = vmatprep.subr.mxu0 0.0
    %326 = vmatpush1.msra.mxu0 0.0
    %327 = vmatprep.subr.mxu0 0.0
    %328 = vmatpush1.msra.mxu0 0.0
    %329 = vmatprep.subr.mxu0 0.0
    %330 = vmatpush1.msra.mxu0 0.0
    %331 = vmatprep.subr.mxu0 0.0
    %332 = vmatpush1.msra.mxu0 0.0
    %333 = vmatprep.subr.mxu0 0.0
    %334 = vmatpush1.msra.mxu0 0.0
    %335 = vmatprep.subr.mxu0 0.0
    %336 = vmatpush1.msra.mxu0 0.0
    %337 = vmatprep.subr.mxu0 0.0
    %338 = vmatpush1.msra.mxu0 0.0
    %339 = vmatprep.subr.mxu0 0.0
    %340 = vmatpush1.msra.mxu0 0.0
    %341 = vmatprep.subr.mxu0 0.0
    %342 = vmatpush1.msra.mxu0 0.0
    %343 = vmatprep.mubr.f32.mxu0 0.0
    %344 = vmatmul.mubr.f32.gmra.mrb[0].mxu0 %v255
    %v345 = vpop.f32.mrb[0].mxu0
    %v346 = vadd.f32 %v277, %v345
    %v347 = vpop.f32.mrb[0].mxu0
    %348 = vdwg.mxu0
    %v349 = vmax.f32 %v346, 0.0
    %v350 = vld [vmem:[%s7] sm:$0xff]
    %v351 = vld [vmem:[%s7 + $0x8] sm:$0xff]
    %v352 = vld [vmem:[%s7 + $0x10] sm:$0xff]
    %v353 = vld [vmem:[%s7 + $0x18] sm:$0xff]
    %v354 = vld [vmem:[%s7 + $0x20] sm:$0xff]
    %v355 = vld [vmem:[%s7 + $0x28] sm:$0xff]
    %v356 = vld [vmem:[%s7 + $0x30] sm:$0xff]
    %v357 = vld [vmem:[%s7 + $0x38] sm:$0xff]
    %v358 = vld [vmem:[%s7 + $0x40] sm:$0xff]
    %v359 = vld [vmem:[%s7 + $0x48] sm:$0xff]
    %v360 = vld [vmem:[%s7 + $0x50] sm:$0xff]
    %v361 = vld [vmem:[%s7 + $0x58] sm:$0xff]
    %v362 = vld [vmem:[%s7 + $0x60] sm:$0xff]
    %v363 = vld [vmem:[%s7 + $0x68] sm:$0xff]
    %v364 = vld [vmem:[%s7 + $0x70] sm:$0xff]
    %v365 = vld [vmem:[%s7 + $0x78] sm:$0xff]
    %v366 = vld [vmem:[%s8] sm:$0x1]
    %v368 = vlaneseq
    %v369 = vshrl.u32 %v368, 7
    %v370 = vsub.s32 0, %v369
    %v371 = vrot.slane %v366, %v370
    %373 = vmatprep.subr.mxu0 0.0
    %374 = vmatpush1.msra.mxu0 %v350
    %375 = vmatprep.subr.mxu0 0.0
    %376 = vmatpush1.msra.mxu0 %v351
    %377 = vmatprep.subr.mxu0 0.0
    %378 = vmatpush1.msra.mxu0 %v352
    %379 = vmatprep.subr.mxu0 0.0
    %380 = vmatpush1.msra.mxu0 %v353
    %381 = vmatprep.subr.mxu0 0.0
    %382 = vmatpush1.msra.mxu0 %v354
    %383 = vmatprep.subr.mxu0 0.0
    %384 = vmatpush1.msra.mxu0 %v355
    %385 = vmatprep.subr.mxu0 0.0
    %386 = vmatpush1.msra.mxu0 %v356
    %387 = vmatprep.subr.mxu0 0.0
    %388 = vmatpush1.msra.mxu0 %v357
    %389 = vmatprep.subr.mxu0 0.0
    %390 = vmatpush1.msra.mxu0 %v358
    %391 = vmatprep.subr.mxu0 0.0
    %392 = vmatpush1.msra.mxu0 %v359
    %393 = vmatprep.subr.mxu0 0.0
    %394 = vmatpush1.msra.mxu0 %v360
    %395 = vmatprep.subr.mxu0 0.0
    %396 = vmatpush1.msra.mxu0 %v361
    %397 = vmatprep.subr.mxu0 0.0
    %398 = vmatpush1.msra.mxu0 %v362
    %399 = vmatprep.subr.mxu0 0.0
    %400 = vmatpush1.msra.mxu0 %v363
    %401 = vmatprep.subr.mxu0 0.0
    %402 = vmatpush1.msra.mxu0 %v364
    %403 = vmatprep.subr.mxu0 0.0
    %404 = vmatpush1.msra.mxu0 %v365
    %405 = vmatprep.subr.mxu0 0.0
    %406 = vmatpush1.msra.mxu0 0.0
    %407 = vmatprep.subr.mxu0 0.0
    %408 = vmatpush1.msra.mxu0 0.0
    %409 = vmatprep.subr.mxu0 0.0
    %410 = vmatpush1.msra.mxu0 0.0
    %411 = vmatprep.subr.mxu0 0.0
    %412 = vmatpush1.msra.mxu0 0.0
    %413 = vmatprep.subr.mxu0 0.0
    %414 = vmatpush1.msra.mxu0 0.0
    %415 = vmatprep.subr.mxu0 0.0
    %416 = vmatpush1.msra.mxu0 0.0
    %417 = vmatprep.subr.mxu0 0.0
    %418 = vmatpush1.msra.mxu0 0.0
    %419 = vmatprep.subr.mxu0 0.0
    %420 = vmatpush1.msra.mxu0 0.0
    %421 = vmatprep.subr.mxu0 0.0
    %422 = vmatpush1.msra.mxu0 0.0
    %423 = vmatprep.subr.mxu0 0.0
    %424 = vmatpush1.msra.mxu0 0.0
    %425 = vmatprep.subr.mxu0 0.0
    %426 = vmatpush1.msra.mxu0 0.0
    %427 = vmatprep.subr.mxu0 0.0
    %428 = vmatpush1.msra.mxu0 0.0
    %429 = vmatprep.subr.mxu0 0.0
    %430 = vmatpush1.msra.mxu0 0.0
    %431 = vmatprep.subr.mxu0 0.0
    %432 = vmatpush1.msra.mxu0 0.0
    %433 = vmatprep.subr.mxu0 0.0
    %434 = vmatpush1.msra.mxu0 0.0
    %435 = vmatprep.subr.mxu0 0.0
    %436 = vmatpush1.msra.mxu0 0.0
    %437 = vmatprep.mubr.f32.mxu0 0.0
    %438 = vmatmul.mubr.f32.gmra.mrb[0].mxu0 %v349
    %v439 = vpop.f32.mrb[0].mxu0
    %v440 = vadd.f32 %v371, %v439
    %v441 = vpop.f32.mrb[0].mxu0
    %442 = vdwg.mxu0
    %443 = vst [vmem:[#allocation2] sm:$0xff] %v440
    %v444 = vld [vmem:[%s9] sm:$0xff]
    %v445 = vld [vmem:[%s9 + $0x8] sm:$0xff]
    %v446 = vld [vmem:[%s9 + $0x10] sm:$0xff]
    %v447 = vld [vmem:[%s9 + $0x18] sm:$0xff]
    %v448 = vld [vmem:[%s9 + $0x20] sm:$0xff]
    %v449 = vld [vmem:[%s9 + $0x28] sm:$0xff]
    %v450 = vld [vmem:[%s9 + $0x30] sm:$0xff]
    %v451 = vld [vmem:[%s9 + $0x38] sm:$0xff]
    %v452 = vld [vmem:[%s9 + $0x40] sm:$0xff]
    %v453 = vld [vmem:[%s9 + $0x48] sm:$0xff]
    %v454 = vld [vmem:[%s9 + $0x50] sm:$0xff]
    %v455 = vld [vmem:[%s9 + $0x58] sm:$0xff]
    %v456 = vld [vmem:[%s9 + $0x60] sm:$0xff]
    %v457 = vld [vmem:[%s9 + $0x68] sm:$0xff]
    %v458 = vld [vmem:[%s9 + $0x70] sm:$0xff]
    %v459 = vld [vmem:[%s9 + $0x78] sm:$0xff]
    %s460 = scalar_lea.vmem %s1, 128
    %v461 = vld [vmem:[%s460] sm:$0xff]
    %v462 = vld [vmem:[%s460 + $0x8] sm:$0xff]
    %v463 = vld [vmem:[%s460 + $0x10] sm:$0xff]
    %v464 = vld [vmem:[%s460 + $0x18] sm:$0xff]
    %v465 = vld [vmem:[%s460 + $0x20] sm:$0xff]
    %v466 = vld [vmem:[%s460 + $0x28] sm:$0xff]
    %v467 = vld [vmem:[%s460 + $0x30] sm:$0xff]
    %v468 = vld [vmem:[%s460 + $0x38] sm:$0xff]
    %v469 = vld [vmem:[%s460 + $0x40] sm:$0xff]
    %v470 = vld [vmem:[%s460 + $0x48] sm:$0xff]
    %v471 = vld [vmem:[%s460 + $0x50] sm:$0xff]
    %v472 = vld [vmem:[%s460 + $0x58] sm:$0xff]
    %v473 = vld [vmem:[%s460 + $0x60] sm:$0xff]
    %v474 = vld [vmem:[%s460 + $0x68] sm:$0xff]
    %v475 = vld [vmem:[%s460 + $0x70] sm:$0xff]
    %v476 = vld [vmem:[%s460 + $0x78] sm:$0xff]
    %s477 = scalar_lea.vmem %s2, 1
    %v478 = vld [vmem:[%s477] sm:$0x1]
    %v480 = vlaneseq
    %v481 = vshrl.u32 %v480, 7
    %v482 = vsub.s32 0, %v481
    %v483 = vrot.slane %v478, %v482
    %485 = vmatprep.subr.mxu0 0.0
    %486 = vmatpush1.msra.mxu0 %v461
    %487 = vmatprep.subr.mxu0 0.0
    %488 = vmatpush1.msra.mxu0 %v462
    %489 = vmatprep.subr.mxu0 0.0
    %490 = vmatpush1.msra.mxu0 %v463
    %491 = vmatprep.subr.mxu0 0.0
    %492 = vmatpush1.msra.mxu0 %v464
    %493 = vmatprep.subr.mxu0 0.0
    %494 = vmatpush1.msra.mxu0 %v465
    %495 = vmatprep.subr.mxu0 0.0
    %496 = vmatpush1.msra.mxu0 %v466
    %497 = vmatprep.subr.mxu0 0.0
    %498 = vmatpush1.msra.mxu0 %v467
    %499 = vmatprep.subr.mxu0 0.0
    %500 = vmatpush1.msra.mxu0 %v468
    %501 = vmatprep.subr.mxu0 0.0
    %502 = vmatpush1.msra.mxu0 %v469
    %503 = vmatprep.subr.mxu0 0.0
    %504 = vmatpush1.msra.mxu0 %v470
    %505 = vmatprep.subr.mxu0 0.0
    %506 = vmatpush1.msra.mxu0 %v471
    %507 = vmatprep.subr.mxu0 0.0
    %508 = vmatpush1.msra.mxu0 %v472
    %509 = vmatprep.subr.mxu0 0.0
    %510 = vmatpush1.msra.mxu0 %v473
    %511 = vmatprep.subr.mxu0 0.0
    %512 = vmatpush1.msra.mxu0 %v474
    %513 = vmatprep.subr.mxu0 0.0
    %514 = vmatpush1.msra.mxu0 %v475
    %515 = vmatprep.subr.mxu0 0.0
    %516 = vmatpush1.msra.mxu0 %v476
    %517 = vmatprep.subr.mxu0 0.0
    %518 = vmatpush1.msra.mxu0 0.0
    %519 = vmatprep.subr.mxu0 0.0
    %520 = vmatpush1.msra.mxu0 0.0
    %521 = vmatprep.subr.mxu0 0.0
    %522 = vmatpush1.msra.mxu0 0.0
    %523 = vmatprep.subr.mxu0 0.0
    %524 = vmatpush1.msra.mxu0 0.0
    %525 = vmatprep.subr.mxu0 0.0
    %526 = vmatpush1.msra.mxu0 0.0
    %527 = vmatprep.subr.mxu0 0.0
    %528 = vmatpush1.msra.mxu0 0.0
    %529 = vmatprep.subr.mxu0 0.0
    %530 = vmatpush1.msra.mxu0 0.0
    %531 = vmatprep.subr.mxu0 0.0
    %532 = vmatpush1.msra.mxu0 0.0
    %533 = vmatprep.subr.mxu0 0.0
    %534 = vmatpush1.msra.mxu0 0.0
    %535 = vmatprep.subr.mxu0 0.0
    %536 = vmatpush1.msra.mxu0 0.0
    %537 = vmatprep.subr.mxu0 0.0
    %538 = vmatpush1.msra.mxu0 0.0
    %539 = vmatprep.subr.mxu0 0.0
    %540 = vmatpush1.msra.mxu0 0.0
    %541 = vmatprep.subr.mxu0 0.0
    %542 = vmatpush1.msra.mxu0 0.0
    %543 = vmatprep.subr.mxu0 0.0
    %544 = vmatpush1.msra.mxu0 0.0
    %545 = vmatprep.subr.mxu0 0.0
    %546 = vmatpush1.msra.mxu0 0.0
    %547 = vmatprep.subr.mxu0 0.0
    %548 = vmatpush1.msra.mxu0 0.0
    %549 = vmatprep.mubr.f32.mxu0 0.0
    %550 = vmatmul.mubr.f32.gmra.mrb[0].mxu0 %v67
    %v551 = vpop.f32.mrb[0].mxu0
    %v552 = vadd.f32 %v483, %v551
    %v553 = vpop.f32.mrb[0].mxu0
    %554 = vdwg.mxu0
    %v555 = vmax.f32 %v552, 0.0
    %s556 = scalar_lea.vmem %s3, 128
    %v557 = vld [vmem:[%s556] sm:$0xff]
    %v558 = vld [vmem:[%s556 + $0x8] sm:$0xff]
    %v559 = vld [vmem:[%s556 + $0x10] sm:$0xff]
    %v560 = vld [vmem:[%s556 + $0x18] sm:$0xff]
    %v561 = vld [vmem:[%s556 + $0x20] sm:$0xff]
    %v562 = vld [vmem:[%s556 + $0x28] sm:$0xff]
    %v563 = vld [vmem:[%s556 + $0x30] sm:$0xff]
    %v564 = vld [vmem:[%s556 + $0x38] sm:$0xff]
    %v565 = vld [vmem:[%s556 + $0x40] sm:$0xff]
    %v566 = vld [vmem:[%s556 + $0x48] sm:$0xff]
    %v567 = vld [vmem:[%s556 + $0x50] sm:$0xff]
    %v568 = vld [vmem:[%s556 + $0x58] sm:$0xff]
    %v569 = vld [vmem:[%s556 + $0x60] sm:$0xff]
    %v570 = vld [vmem:[%s556 + $0x68] sm:$0xff]
    %v571 = vld [vmem:[%s556 + $0x70] sm:$0xff]
    %v572 = vld [vmem:[%s556 + $0x78] sm:$0xff]
    %s573 = scalar_lea.vmem %s4, 1
    %v574 = vld [vmem:[%s573] sm:$0x1]
    %v576 = vlaneseq
    %v577 = vshrl.u32 %v576, 7
    %v578 = vsub.s32 0, %v577
    %v579 = vrot.slane %v574, %v578
    %581 = vmatprep.subr.mxu0 0.0
    %582 = vmatpush1.msra.mxu0 %v557
    %583 = vmatprep.subr.mxu0 0.0
    %584 = vmatpush1.msra.mxu0 %v558
    %585 = vmatprep.subr.mxu0 0.0
    %586 = vmatpush1.msra.mxu0 %v559
    %587 = vmatprep.subr.mxu0 0.0
    %588 = vmatpush1.msra.mxu0 %v560
    %589 = vmatprep.subr.mxu0 0.0
    %590 = vmatpush1.msra.mxu0 %v561
    %591 = vmatprep.subr.mxu0 0.0
    %592 = vmatpush1.msra.mxu0 %v562
    %593 = vmatprep.subr.mxu0 0.0
    %594 = vmatpush1.msra.mxu0 %v563
    %595 = vmatprep.subr.mxu0 0.0
    %596 = vmatpush1.msra.mxu0 %v564
    %597 = vmatprep.subr.mxu0 0.0
    %598 = vmatpush1.msra.mxu0 %v565
    %599 = vmatprep.subr.mxu0 0.0
    %600 = vmatpush1.msra.mxu0 %v566
    %601 = vmatprep.subr.mxu0 0.0
    %602 = vmatpush1.msra.mxu0 %v567
    %603 = vmatprep.subr.mxu0 0.0
    %604 = vmatpush1.msra.mxu0 %v568
    %605 = vmatprep.subr.mxu0 0.0
    %606 = vmatpush1.msra.mxu0 %v569
    %607 = vmatprep.subr.mxu0 0.0
    %608 = vmatpush1.msra.mxu0 %v570
    %609 = vmatprep.subr.mxu0 0.0
    %610 = vmatpush1.msra.mxu0 %v571
    %611 = vmatprep.subr.mxu0 0.0
    %612 = vmatpush1.msra.mxu0 %v572
    %613 = vmatprep.subr.mxu0 0.0
    %614 = vmatpush1.msra.mxu0 0.0
    %615 = vmatprep.subr.mxu0 0.0
    %616 = vmatpush1.msra.mxu0 0.0
    %617 = vmatprep.subr.mxu0 0.0
    %618 = vmatpush1.msra.mxu0 0.0
    %619 = vmatprep.subr.mxu0 0.0
    %620 = vmatpush1.msra.mxu0 0.0
    %621 = vmatprep.subr.mxu0 0.0
    %622 = vmatpush1.msra.mxu0 0.0
    %623 = vmatprep.subr.mxu0 0.0
    %624 = vmatpush1.msra.mxu0 0.0
    %625 = vmatprep.subr.mxu0 0.0
    %626 = vmatpush1.msra.mxu0 0.0
    %627 = vmatprep.subr.mxu0 0.0
    %628 = vmatpush1.msra.mxu0 0.0
    %629 = vmatprep.subr.mxu0 0.0
    %630 = vmatpush1.msra.mxu0 0.0
    %631 = vmatprep.subr.mxu0 0.0
    %632 = vmatpush1.msra.mxu0 0.0
    %633 = vmatprep.subr.mxu0 0.0
    %634 = vmatpush1.msra.mxu0 0.0
    %635 = vmatprep.subr.mxu0 0.0
    %636 = vmatpush1.msra.mxu0 0.0
    %637 = vmatprep.subr.mxu0 0.0
    %638 = vmatpush1.msra.mxu0 0.0
    %639 = vmatprep.subr.mxu0 0.0
    %640 = vmatpush1.msra.mxu0 0.0
    %641 = vmatprep.subr.mxu0 0.0
    %642 = vmatpush1.msra.mxu0 0.0
    %643 = vmatprep.subr.mxu0 0.0
    %644 = vmatpush1.msra.mxu0 0.0
    %645 = vmatprep.mubr.f32.mxu0 0.0
    %646 = vmatmul.mubr.f32.gmra.mrb[0].mxu0 %v555
    %v647 = vpop.f32.mrb[0].mxu0
    %v648 = vadd.f32 %v579, %v647
    %v649 = vpop.f32.mrb[0].mxu0
    %650 = vdwg.mxu0
    %v651 = vmax.f32 %v648, 0.0
    %s652 = scalar_lea.vmem %s5, 128
    %v653 = vld [vmem:[%s652] sm:$0xff]
    %v654 = vld [vmem:[%s652 + $0x8] sm:$0xff]
    %v655 = vld [vmem:[%s652 + $0x10] sm:$0xff]
    %v656 = vld [vmem:[%s652 + $0x18] sm:$0xff]
    %v657 = vld [vmem:[%s652 + $0x20] sm:$0xff]
    %v658 = vld [vmem:[%s652 + $0x28] sm:$0xff]
    %v659 = vld [vmem:[%s652 + $0x30] sm:$0xff]
    %v660 = vld [vmem:[%s652 + $0x38] sm:$0xff]
    %v661 = vld [vmem:[%s652 + $0x40] sm:$0xff]
    %v662 = vld [vmem:[%s652 + $0x48] sm:$0xff]
    %v663 = vld [vmem:[%s652 + $0x50] sm:$0xff]
    %v664 = vld [vmem:[%s652 + $0x58] sm:$0xff]
    %v665 = vld [vmem:[%s652 + $0x60] sm:$0xff]
    %v666 = vld [vmem:[%s652 + $0x68] sm:$0xff]
    %v667 = vld [vmem:[%s652 + $0x70] sm:$0xff]
    %v668 = vld [vmem:[%s652 + $0x78] sm:$0xff]
    %s669 = scalar_lea.vmem %s6, 1
    %v670 = vld [vmem:[%s669] sm:$0x1]
    %v672 = vlaneseq
    %v673 = vshrl.u32 %v672, 7
    %v674 = vsub.s32 0, %v673
    %v675 = vrot.slane %v670, %v674
    %677 = vmatprep.subr.mxu0 0.0
    %678 = vmatpush1.msra.mxu0 %v653
    %679 = vmatprep.subr.mxu0 0.0
    %680 = vmatpush1.msra.mxu0 %v654
    %681 = vmatprep.subr.mxu0 0.0
    %682 = vmatpush1.msra.mxu0 %v655
    %683 = vmatprep.subr.mxu0 0.0
    %684 = vmatpush1.msra.mxu0 %v656
    %685 = vmatprep.subr.mxu0 0.0
    %686 = vmatpush1.msra.mxu0 %v657
    %687 = vmatprep.subr.mxu0 0.0
    %688 = vmatpush1.msra.mxu0 %v658
    %689 = vmatprep.subr.mxu0 0.0
    %690 = vmatpush1.msra.mxu0 %v659
    %691 = vmatprep.subr.mxu0 0.0
    %692 = vmatpush1.msra.mxu0 %v660
    %693 = vmatprep.subr.mxu0 0.0
    %694 = vmatpush1.msra.mxu0 %v661
    %695 = vmatprep.subr.mxu0 0.0
    %696 = vmatpush1.msra.mxu0 %v662
    %697 = vmatprep.subr.mxu0 0.0
    %698 = vmatpush1.msra.mxu0 %v663
    %699 = vmatprep.subr.mxu0 0.0
    %700 = vmatpush1.msra.mxu0 %v664
    %701 = vmatprep.subr.mxu0 0.0
    %702 = vmatpush1.msra.mxu0 %v665
    %703 = vmatprep.subr.mxu0 0.0
    %704 = vmatpush1.msra.mxu0 %v666
    %705 = vmatprep.subr.mxu0 0.0
    %706 = vmatpush1.msra.mxu0 %v667
    %707 = vmatprep.subr.mxu0 0.0
    %708 = vmatpush1.msra.mxu0 %v668
    %709 = vmatprep.subr.mxu0 0.0
    %710 = vmatpush1.msra.mxu0 0.0
    %711 = vmatprep.subr.mxu0 0.0
    %712 = vmatpush1.msra.mxu0 0.0
    %713 = vmatprep.subr.mxu0 0.0
    %714 = vmatpush1.msra.mxu0 0.0
    %715 = vmatprep.subr.mxu0 0.0
    %716 = vmatpush1.msra.mxu0 0.0
    %717 = vmatprep.subr.mxu0 0.0
    %718 = vmatpush1.msra.mxu0 0.0
    %719 = vmatprep.subr.mxu0 0.0
    %720 = vmatpush1.msra.mxu0 0.0
    %721 = vmatprep.subr.mxu0 0.0
    %722 = vmatpush1.msra.mxu0 0.0
    %723 = vmatprep.subr.mxu0 0.0
    %724 = vmatpush1.msra.mxu0 0.0
    %725 = vmatprep.subr.mxu0 0.0
    %726 = vmatpush1.msra.mxu0 0.0
    %727 = vmatprep.subr.mxu0 0.0
    %728 = vmatpush1.msra.mxu0 0.0
    %729 = vmatprep.subr.mxu0 0.0
    %730 = vmatpush1.msra.mxu0 0.0
    %731 = vmatprep.subr.mxu0 0.0
    %732 = vmatpush1.msra.mxu0 0.0
    %733 = vmatprep.subr.mxu0 0.0
    %734 = vmatpush1.msra.mxu0 0.0
    %735 = vmatprep.subr.mxu0 0.0
    %736 = vmatpush1.msra.mxu0 0.0
    %737 = vmatprep.subr.mxu0 0.0
    %738 = vmatpush1.msra.mxu0 0.0
    %739 = vmatprep.subr.mxu0 0.0
    %740 = vmatpush1.msra.mxu0 0.0
    %741 = vmatprep.mubr.f32.mxu0 0.0
    %742 = vmatmul.mubr.f32.gmra.mrb[0].mxu0 %v651
    %v743 = vpop.f32.mrb[0].mxu0
    %v744 = vadd.f32 %v675, %v743
    %v745 = vpop.f32.mrb[0].mxu0
    %746 = vdwg.mxu0
    %v747 = vmax.f32 %v744, 0.0
    %s748 = scalar_lea.vmem %s7, 128
    %v749 = vld [vmem:[%s748] sm:$0xff]
    %v750 = vld [vmem:[%s748 + $0x8] sm:$0xff]
    %v751 = vld [vmem:[%s748 + $0x10] sm:$0xff]
    %v752 = vld [vmem:[%s748 + $0x18] sm:$0xff]
    %v753 = vld [vmem:[%s748 + $0x20] sm:$0xff]
    %v754 = vld [vmem:[%s748 + $0x28] sm:$0xff]
    %v755 = vld [vmem:[%s748 + $0x30] sm:$0xff]
    %v756 = vld [vmem:[%s748 + $0x38] sm:$0xff]
    %v757 = vld [vmem:[%s748 + $0x40] sm:$0xff]
    %v758 = vld [vmem:[%s748 + $0x48] sm:$0xff]
    %v759 = vld [vmem:[%s748 + $0x50] sm:$0xff]
    %v760 = vld [vmem:[%s748 + $0x58] sm:$0xff]
    %v761 = vld [vmem:[%s748 + $0x60] sm:$0xff]
    %v762 = vld [vmem:[%s748 + $0x68] sm:$0xff]
    %v763 = vld [vmem:[%s748 + $0x70] sm:$0xff]
    %v764 = vld [vmem:[%s748 + $0x78] sm:$0xff]
    %s765 = scalar_lea.vmem %s8, 1
    %v766 = vld [vmem:[%s765] sm:$0x1]
    %v768 = vlaneseq
    %v769 = vshrl.u32 %v768, 7
    %v770 = vsub.s32 0, %v769
    %v771 = vrot.slane %v766, %v770
    %773 = vmatprep.subr.mxu0 0.0
    %774 = vmatpush1.msra.mxu0 %v749
    %775 = vmatprep.subr.mxu0 0.0
    %776 = vmatpush1.msra.mxu0 %v750
    %777 = vmatprep.subr.mxu0 0.0
    %778 = vmatpush1.msra.mxu0 %v751
    %779 = vmatprep.subr.mxu0 0.0
    %780 = vmatpush1.msra.mxu0 %v752
    %781 = vmatprep.subr.mxu0 0.0
    %782 = vmatpush1.msra.mxu0 %v753
    %783 = vmatprep.subr.mxu0 0.0
    %784 = vmatpush1.msra.mxu0 %v754
    %785 = vmatprep.subr.mxu0 0.0
    %786 = vmatpush1.msra.mxu0 %v755
    %787 = vmatprep.subr.mxu0 0.0
    %788 = vmatpush1.msra.mxu0 %v756
    %789 = vmatprep.subr.mxu0 0.0
    %790 = vmatpush1.msra.mxu0 %v757
    %791 = vmatprep.subr.mxu0 0.0
    %792 = vmatpush1.msra.mxu0 %v758
    %793 = vmatprep.subr.mxu0 0.0
    %794 = vmatpush1.msra.mxu0 %v759
    %795 = vmatprep.subr.mxu0 0.0
    %796 = vmatpush1.msra.mxu0 %v760
    %797 = vmatprep.subr.mxu0 0.0
    %798 = vmatpush1.msra.mxu0 %v761
    %799 = vmatprep.subr.mxu0 0.0
    %800 = vmatpush1.msra.mxu0 %v762
    %801 = vmatprep.subr.mxu0 0.0
    %802 = vmatpush1.msra.mxu0 %v763
    %803 = vmatprep.subr.mxu0 0.0
    %804 = vmatpush1.msra.mxu0 %v764
    %805 = vmatprep.subr.mxu0 0.0
    %806 = vmatpush1.msra.mxu0 0.0
    %807 = vmatprep.subr.mxu0 0.0
    %808 = vmatpush1.msra.mxu0 0.0
    %809 = vmatprep.subr.mxu0 0.0
    %810 = vmatpush1.msra.mxu0 0.0
    %811 = vmatprep.subr.mxu0 0.0
    %812 = vmatpush1.msra.mxu0 0.0
    %813 = vmatprep.subr.mxu0 0.0
    %814 = vmatpush1.msra.mxu0 0.0
    %815 = vmatprep.subr.mxu0 0.0
    %816 = vmatpush1.msra.mxu0 0.0
    %817 = vmatprep.subr.mxu0 0.0
    %818 = vmatpush1.msra.mxu0 0.0
    %819 = vmatprep.subr.mxu0 0.0
    %820 = vmatpush1.msra.mxu0 0.0
    %821 = vmatprep.subr.mxu0 0.0
    %822 = vmatpush1.msra.mxu0 0.0
    %823 = vmatprep.subr.mxu0 0.0
    %824 = vmatpush1.msra.mxu0 0.0
    %825 = vmatprep.subr.mxu0 0.0
    %826 = vmatpush1.msra.mxu0 0.0
    %827 = vmatprep.subr.mxu0 0.0
    %828 = vmatpush1.msra.mxu0 0.0
    %829 = vmatprep.subr.mxu0 0.0
    %830 = vmatpush1.msra.mxu0 0.0
    %831 = vmatprep.subr.mxu0 0.0
    %832 = vmatpush1.msra.mxu0 0.0
    %833 = vmatprep.subr.mxu0 0.0
    %834 = vmatpush1.msra.mxu0 0.0
    %835 = vmatprep.subr.mxu0 0.0
    %836 = vmatpush1.msra.mxu0 0.0
    %837 = vmatprep.mubr.f32.mxu0 0.0
    %838 = vmatmul.mubr.f32.gmra.mrb[0].mxu0 %v747
    %v839 = vpop.f32.mrb[0].mxu0
    %v840 = vadd.f32 %v771, %v839
    %v841 = vpop.f32.mrb[0].mxu0
    %842 = vdwg.mxu0
    %s843 = scalar_lea.vmem [#allocation2], 8
    %844 = vst [vmem:[%s843] sm:$0xff] %v840
    %s845 = scalar_lea.vmem %s9, 128
    %v846 = vld [vmem:[%s845] sm:$0xff]
    %v847 = vld [vmem:[%s845 + $0x8] sm:$0xff]
    %v848 = vld [vmem:[%s845 + $0x10] sm:$0xff]
    %v849 = vld [vmem:[%s845 + $0x18] sm:$0xff]
    %v850 = vld [vmem:[%s845 + $0x20] sm:$0xff]
    %v851 = vld [vmem:[%s845 + $0x28] sm:$0xff]
    %v852 = vld [vmem:[%s845 + $0x30] sm:$0xff]
    %v853 = vld [vmem:[%s845 + $0x38] sm:$0xff]
    %v854 = vld [vmem:[%s845 + $0x40] sm:$0xff]
    %v855 = vld [vmem:[%s845 + $0x48] sm:$0xff]
    %v856 = vld [vmem:[%s845 + $0x50] sm:$0xff]
    %v857 = vld [vmem:[%s845 + $0x58] sm:$0xff]
    %v858 = vld [vmem:[%s845 + $0x60] sm:$0xff]
    %v859 = vld [vmem:[%s845 + $0x68] sm:$0xff]
    %v860 = vld [vmem:[%s845 + $0x70] sm:$0xff]
    %v861 = vld [vmem:[%s845 + $0x78] sm:$0xff]
    %862 = vmatprep.subr.mxu0 0.0
    %863 = vmatpush1.msra.mxu0 %v846
    %864 = vmatprep.subr.mxu0 0.0
    %865 = vmatpush1.msra.mxu0 %v847
    %866 = vmatprep.subr.mxu0 0.0
    %867 = vmatpush1.msra.mxu0 %v848
    %868 = vmatprep.subr.mxu0 0.0
    %869 = vmatpush1.msra.mxu0 %v849
    %870 = vmatprep.subr.mxu0 0.0
    %871 = vmatpush1.msra.mxu0 %v850
    %872 = vmatprep.subr.mxu0 0.0
    %873 = vmatpush1.msra.mxu0 %v851
    %874 = vmatprep.subr.mxu0 0.0
    %875 = vmatpush1.msra.mxu0 %v852
    %876 = vmatprep.subr.mxu0 0.0
    %877 = vmatpush1.msra.mxu0 %v853
    %878 = vmatprep.subr.mxu0 0.0
    %879 = vmatpush1.msra.mxu0 %v854
    %880 = vmatprep.subr.mxu0 0.0
    %881 = vmatpush1.msra.mxu0 %v855
    %882 = vmatprep.subr.mxu0 0.0
    %883 = vmatpush1.msra.mxu0 %v856
    %884 = vmatprep.subr.mxu0 0.0
    %885 = vmatpush1.msra.mxu0 %v857
    %886 = vmatprep.subr.mxu0 0.0
    %887 = vmatpush1.msra.mxu0 %v858
    %888 = vmatprep.subr.mxu0 0.0
    %889 = vmatpush1.msra.mxu0 %v859
    %890 = vmatprep.subr.mxu0 0.0
    %891 = vmatpush1.msra.mxu0 %v860
    %892 = vmatprep.subr.mxu0 0.0
    %893 = vmatpush1.msra.mxu0 %v861
    %894 = vmatprep.subr.mxu0 0.0
    %895 = vmatpush1.msra.mxu0 0.0
    %896 = vmatprep.subr.mxu0 0.0
    %897 = vmatpush1.msra.mxu0 0.0
    %898 = vmatprep.subr.mxu0 0.0
    %899 = vmatpush1.msra.mxu0 0.0
    %900 = vmatprep.subr.mxu0 0.0
    %901 = vmatpush1.msra.mxu0 0.0
    %902 = vmatprep.subr.mxu0 0.0
    %903 = vmatpush1.msra.mxu0 0.0
    %904 = vmatprep.subr.mxu0 0.0
    %905 = vmatpush1.msra.mxu0 0.0
    %906 = vmatprep.subr.mxu0 0.0
    %907 = vmatpush1.msra.mxu0 0.0
    %908 = vmatprep.subr.mxu0 0.0
    %909 = vmatpush1.msra.mxu0 0.0
    %910 = vmatprep.subr.mxu0 0.0
    %911 = vmatpush1.msra.mxu0 0.0
    %912 = vmatprep.subr.mxu0 0.0
    %913 = vmatpush1.msra.mxu0 0.0
    %914 = vmatprep.subr.mxu0 0.0
    %915 = vmatpush1.msra.mxu0 0.0
    %916 = vmatprep.subr.mxu0 0.0
    %917 = vmatpush1.msra.mxu0 0.0
    %918 = vmatprep.subr.mxu0 0.0
    %919 = vmatpush1.msra.mxu0 0.0
    %920 = vmatprep.subr.mxu0 0.0
    %921 = vmatpush1.msra.mxu0 0.0
    %922 = vmatprep.subr.mxu0 0.0
    %923 = vmatpush1.msra.mxu0 0.0
    %924 = vmatprep.subr.mxu0 0.0
    %925 = vmatpush1.msra.mxu0 0.0
    %926 = vmatprep.mubr.f32.mxu0 0.0
    %927 = vmatmul.mubr.f32.gmra.mrb[0].mxu0 %v840
    %v928 = vpop.f32.mrb[0].mxu0
    %v929 = vadd.f32 0.0, %v928
    %v930 = vpop.f32.mrb[0].mxu0
    %931 = vdwg.mxu0
    %932 = vmatprep.subr.mxu0 0.0
    %933 = vmatpush1.msra.mxu0 %v444
    %934 = vmatprep.subr.mxu0 0.0
    %935 = vmatpush1.msra.mxu0 %v445
    %936 = vmatprep.subr.mxu0 0.0
    %937 = vmatpush1.msra.mxu0 %v446
    %938 = vmatprep.subr.mxu0 0.0
    %939 = vmatpush1.msra.mxu0 %v447
    %940 = vmatprep.subr.mxu0 0.0
    %941 = vmatpush1.msra.mxu0 %v448
    %942 = vmatprep.subr.mxu0 0.0
    %943 = vmatpush1.msra.mxu0 %v449
    %944 = vmatprep.subr.mxu0 0.0
    %945 = vmatpush1.msra.mxu0 %v450
    %946 = vmatprep.subr.mxu0 0.0
    %947 = vmatpush1.msra.mxu0 %v451
    %948 = vmatprep.subr.mxu0 0.0
    %949 = vmatpush1.msra.mxu0 %v452
    %950 = vmatprep.subr.mxu0 0.0
    %951 = vmatpush1.msra.mxu0 %v453
    %952 = vmatprep.subr.mxu0 0.0
    %953 = vmatpush1.msra.mxu0 %v454
    %954 = vmatprep.subr.mxu0 0.0
    %955 = vmatpush1.msra.mxu0 %v455
    %956 = vmatprep.subr.mxu0 0.0
    %957 = vmatpush1.msra.mxu0 %v456
    %958 = vmatprep.subr.mxu0 0.0
    %959 = vmatpush1.msra.mxu0 %v457
    %960 = vmatprep.subr.mxu0 0.0
    %961 = vmatpush1.msra.mxu0 %v458
    %962 = vmatprep.subr.mxu0 0.0
    %963 = vmatpush1.msra.mxu0 %v459
    %964 = vmatprep.subr.mxu0 0.0
    %965 = vmatpush1.msra.mxu0 0.0
    %966 = vmatprep.subr.mxu0 0.0
    %967 = vmatpush1.msra.mxu0 0.0
    %968 = vmatprep.subr.mxu0 0.0
    %969 = vmatpush1.msra.mxu0 0.0
    %970 = vmatprep.subr.mxu0 0.0
    %971 = vmatpush1.msra.mxu0 0.0
    %972 = vmatprep.subr.mxu0 0.0
    %973 = vmatpush1.msra.mxu0 0.0
    %974 = vmatprep.subr.mxu0 0.0
    %975 = vmatpush1.msra.mxu0 0.0
    %976 = vmatprep.subr.mxu0 0.0
    %977 = vmatpush1.msra.mxu0 0.0
    %978 = vmatprep.subr.mxu0 0.0
    %979 = vmatpush1.msra.mxu0 0.0
    %980 = vmatprep.subr.mxu0 0.0
    %981 = vmatpush1.msra.mxu0 0.0
    %982 = vmatprep.subr.mxu0 0.0
    %983 = vmatpush1.msra.mxu0 0.0
    %984 = vmatprep.subr.mxu0 0.0
    %985 = vmatpush1.msra.mxu0 0.0
    %986 = vmatprep.subr.mxu0 0.0
    %987 = vmatpush1.msra.mxu0 0.0
    %988 = vmatprep.subr.mxu0 0.0
    %989 = vmatpush1.msra.mxu0 0.0
    %990 = vmatprep.subr.mxu0 0.0
    %991 = vmatpush1.msra.mxu0 0.0
    %992 = vmatprep.subr.mxu0 0.0
    %993 = vmatpush1.msra.mxu0 0.0
    %994 = vmatprep.subr.mxu0 0.0
    %995 = vmatpush1.msra.mxu0 0.0
    %996 = vmatprep.mubr.f32.mxu0 0.0
    %997 = vmatmul.mubr.f32.gmra.mrb[0].mxu0 %v440
    %v998 = vpop.f32.mrb[0].mxu0
    %v999 = vadd.f32 %v929, %v998
    %v1000 = vpop.f32.mrb[0].mxu0
    %1001 = vdwg.mxu0
    %s1002 = scalar_lea.vmem %s1, 256
    %v1003 = vld [vmem:[%s1002] sm:$0xff]
    %v1004 = vld [vmem:[%s1002 + $0x8] sm:$0xff]
    %v1005 = vld [vmem:[%s1002 + $0x10] sm:$0xff]
    %v1006 = vld [vmem:[%s1002 + $0x18] sm:$0xff]
    %v1007 = vld [vmem:[%s1002 + $0x20] sm:$0xff]
    %v1008 = vld [vmem:[%s1002 + $0x28] sm:$0xff]
    %v1009 = vld [vmem:[%s1002 + $0x30] sm:$0xff]
    %v1010 = vld [vmem:[%s1002 + $0x38] sm:$0xff]
    %v1011 = vld [vmem:[%s1002 + $0x40] sm:$0xff]
    %v1012 = vld [vmem:[%s1002 + $0x48] sm:$0xff]
    %v1013 = vld [vmem:[%s1002 + $0x50] sm:$0xff]
    %v1014 = vld [vmem:[%s1002 + $0x58] sm:$0xff]
    %v1015 = vld [vmem:[%s1002 + $0x60] sm:$0xff]
    %v1016 = vld [vmem:[%s1002 + $0x68] sm:$0xff]
    %v1017 = vld [vmem:[%s1002 + $0x70] sm:$0xff]
    %v1018 = vld [vmem:[%s1002 + $0x78] sm:$0xff]
    %s1019 = scalar_lea.vmem %s2, 2
    %v1020 = vld [vmem:[%s1019] sm:$0x1]
    %v1022 = vlaneseq
    %v1023 = vshrl.u32 %v1022, 7
    %v1024 = vsub.s32 0, %v1023
    %v1025 = vrot.slane %v1020, %v1024
    %1027 = vmatprep.subr.mxu0 0.0
    %1028 = vmatpush1.msra.mxu0 %v1003
    %1029 = vmatprep.subr.mxu0 0.0
    %1030 = vmatpush1.msra.mxu0 %v1004
    %1031 = vmatprep.subr.mxu0 0.0
    %1032 = vmatpush1.msra.mxu0 %v1005
    %1033 = vmatprep.subr.mxu0 0.0
    %1034 = vmatpush1.msra.mxu0 %v1006
    %1035 = vmatprep.subr.mxu0 0.0
    %1036 = vmatpush1.msra.mxu0 %v1007
    %1037 = vmatprep.subr.mxu0 0.0
    %1038 = vmatpush1.msra.mxu0 %v1008
    %1039 = vmatprep.subr.mxu0 0.0
    %1040 = vmatpush1.msra.mxu0 %v1009
    %1041 = vmatprep.subr.mxu0 0.0
    %1042 = vmatpush1.msra.mxu0 %v1010
    %1043 = vmatprep.subr.mxu0 0.0
    %1044 = vmatpush1.msra.mxu0 %v1011
    %1045 = vmatprep.subr.mxu0 0.0
    %1046 = vmatpush1.msra.mxu0 %v1012
    %1047 = vmatprep.subr.mxu0 0.0
    %1048 = vmatpush1.msra.mxu0 %v1013
    %1049 = vmatprep.subr.mxu0 0.0
    %1050 = vmatpush1.msra.mxu0 %v1014
    %1051 = vmatprep.subr.mxu0 0.0
    %1052 = vmatpush1.msra.mxu0 %v1015
    %1053 = vmatprep.subr.mxu0 0.0
    %1054 = vmatpush1.msra.mxu0 %v1016
    %1055 = vmatprep.subr.mxu0 0.0
    %1056 = vmatpush1.msra.mxu0 %v1017
    %1057 = vmatprep.subr.mxu0 0.0
    %1058 = vmatpush1.msra.mxu0 %v1018
    %1059 = vmatprep.subr.mxu0 0.0
    %1060 = vmatpush1.msra.mxu0 0.0
    %1061 = vmatprep.subr.mxu0 0.0
    %1062 = vmatpush1.msra.mxu0 0.0
    %1063 = vmatprep.subr.mxu0 0.0
    %1064 = vmatpush1.msra.mxu0 0.0
    %1065 = vmatprep.subr.mxu0 0.0
    %1066 = vmatpush1.msra.mxu0 0.0
    %1067 = vmatprep.subr.mxu0 0.0
    %1068 = vmatpush1.msra.mxu0 0.0
    %1069 = vmatprep.subr.mxu0 0.0
    %1070 = vmatpush1.msra.mxu0 0.0
    %1071 = vmatprep.subr.mxu0 0.0
    %1072 = vmatpush1.msra.mxu0 0.0
    %1073 = vmatprep.subr.mxu0 0.0
    %1074 = vmatpush1.msra.mxu0 0.0
    %1075 = vmatprep.subr.mxu0 0.0
    %1076 = vmatpush1.msra.mxu0 0.0
    %1077 = vmatprep.subr.mxu0 0.0
    %1078 = vmatpush1.msra.mxu0 0.0
    %1079 = vmatprep.subr.mxu0 0.0
    %1080 = vmatpush1.msra.mxu0 0.0
    %1081 = vmatprep.subr.mxu0 0.0
    %1082 = vmatpush1.msra.mxu0 0.0
    %1083 = vmatprep.subr.mxu0 0.0
    %1084 = vmatpush1.msra.mxu0 0.0
    %1085 = vmatprep.subr.mxu0 0.0
    %1086 = vmatpush1.msra.mxu0 0.0
    %1087 = vmatprep.subr.mxu0 0.0
    %1088 = vmatpush1.msra.mxu0 0.0
    %1089 = vmatprep.subr.mxu0 0.0
    %1090 = vmatpush1.msra.mxu0 0.0
    %1091 = vmatprep.mubr.f32.mxu0 0.0
    %1092 = vmatmul.mubr.f32.gmra.mrb[0].mxu0 %v67
    %v1093 = vpop.f32.mrb[0].mxu0
    %v1094 = vadd.f32 %v1025, %v1093
    %v1095 = vpop.f32.mrb[0].mxu0
    %1096 = vdwg.mxu0
    %v1097 = vmax.f32 %v1094, 0.0
    %s1098 = scalar_lea.vmem %s3, 256
    %v1099 = vld [vmem:[%s1098] sm:$0xff]
    %v1100 = vld [vmem:[%s1098 + $0x8] sm:$0xff]
    %v1101 = vld [vmem:[%s1098 + $0x10] sm:$0xff]
    %v1102 = vld [vmem:[%s1098 + $0x18] sm:$0xff]
    %v1103 = vld [vmem:[%s1098 + $0x20] sm:$0xff]
    %v1104 = vld [vmem:[%s1098 + $0x28] sm:$0xff]
    %v1105 = vld [vmem:[%s1098 + $0x30] sm:$0xff]
    %v1106 = vld [vmem:[%s1098 + $0x38] sm:$0xff]
    %v1107 = vld [vmem:[%s1098 + $0x40] sm:$0xff]
    %v1108 = vld [vmem:[%s1098 + $0x48] sm:$0xff]
    %v1109 = vld [vmem:[%s1098 + $0x50] sm:$0xff]
    %v1110 = vld [vmem:[%s1098 + $0x58] sm:$0xff]
    %v1111 = vld [vmem:[%s1098 + $0x60] sm:$0xff]
    %v1112 = vld [vmem:[%s1098 + $0x68] sm:$0xff]
    %v1113 = vld [vmem:[%s1098 + $0x70] sm:$0xff]
    %v1114 = vld [vmem:[%s1098 + $0x78] sm:$0xff]
    %s1115 = scalar_lea.vmem %s4, 2
    %v1116 = vld [vmem:[%s1115] sm:$0x1]
    %v1118 = vlaneseq
    %v1119 = vshrl.u32 %v1118, 7
    %v1120 = vsub.s32 0, %v1119
    %v1121 = vrot.slane %v1116, %v1120
    %1123 = vmatprep.subr.mxu0 0.0
    %1124 = vmatpush1.msra.mxu0 %v1099
    %1125 = vmatprep.subr.mxu0 0.0
    %1126 = vmatpush1.msra.mxu0 %v1100
    %1127 = vmatprep.subr.mxu0 0.0
    %1128 = vmatpush1.msra.mxu0 %v1101
    %1129 = vmatprep.subr.mxu0 0.0
    %1130 = vmatpush1.msra.mxu0 %v1102
    %1131 = vmatprep.subr.mxu0 0.0
    %1132 = vmatpush1.msra.mxu0 %v1103
    %1133 = vmatprep.subr.mxu0 0.0
    %1134 = vmatpush1.msra.mxu0 %v1104
    %1135 = vmatprep.subr.mxu0 0.0
    %1136 = vmatpush1.msra.mxu0 %v1105
    %1137 = vmatprep.subr.mxu0 0.0
    %1138 = vmatpush1.msra.mxu0 %v1106
    %1139 = vmatprep.subr.mxu0 0.0
    %1140 = vmatpush1.msra.mxu0 %v1107
    %1141 = vmatprep.subr.mxu0 0.0
    %1142 = vmatpush1.msra.mxu0 %v1108
    %1143 = vmatprep.subr.mxu0 0.0
    %1144 = vmatpush1.msra.mxu0 %v1109
    %1145 = vmatprep.subr.mxu0 0.0
    %1146 = vmatpush1.msra.mxu0 %v1110
    %1147 = vmatprep.subr.mxu0 0.0
    %1148 = vmatpush1.msra.mxu0 %v1111
    %1149 = vmatprep.subr.mxu0 0.0
    %1150 = vmatpush1.msra.mxu0 %v1112
    %1151 = vmatprep.subr.mxu0 0.0
    %1152 = vmatpush1.msra.mxu0 %v1113
    %1153 = vmatprep.subr.mxu0 0.0
    %1154 = vmatpush1.msra.mxu0 %v1114
    %1155 = vmatprep.subr.mxu0 0.0
    %1156 = vmatpush1.msra.mxu0 0.0
    %1157 = vmatprep.subr.mxu0 0.0
    %1158 = vmatpush1.msra.mxu0 0.0
    %1159 = vmatprep.subr.mxu0 0.0
    %1160 = vmatpush1.msra.mxu0 0.0
    %1161 = vmatprep.subr.mxu0 0.0
    %1162 = vmatpush1.msra.mxu0 0.0
    %1163 = vmatprep.subr.mxu0 0.0
    %1164 = vmatpush1.msra.mxu0 0.0
    %1165 = vmatprep.subr.mxu0 0.0
    %1166 = vmatpush1.msra.mxu0 0.0
    %1167 = vmatprep.subr.mxu0 0.0
    %1168 = vmatpush1.msra.mxu0 0.0
    %1169 = vmatprep.subr.mxu0 0.0
    %1170 = vmatpush1.msra.mxu0 0.0
    %1171 = vmatprep.subr.mxu0 0.0
    %1172 = vmatpush1.msra.mxu0 0.0
    %1173 = vmatprep.subr.mxu0 0.0
    %1174 = vmatpush1.msra.mxu0 0.0
    %1175 = vmatprep.subr.mxu0 0.0
    %1176 = vmatpush1.msra.mxu0 0.0
    %1177 = vmatprep.subr.mxu0 0.0
    %1178 = vmatpush1.msra.mxu0 0.0
    %1179 = vmatprep.subr.mxu0 0.0
    %1180 = vmatpush1.msra.mxu0 0.0
    %1181 = vmatprep.subr.mxu0 0.0
    %1182 = vmatpush1.msra.mxu0 0.0
    %1183 = vmatprep.subr.mxu0 0.0
    %1184 = vmatpush1.msra.mxu0 0.0
    %1185 = vmatprep.subr.mxu0 0.0
    %1186 = vmatpush1.msra.mxu0 0.0
    %1187 = vmatprep.mubr.f32.mxu0 0.0
    %1188 = vmatmul.mubr.f32.gmra.mrb[0].mxu0 %v1097
    %v1189 = vpop.f32.mrb[0].mxu0
    %v1190 = vadd.f32 %v1121, %v1189
    %v1191 = vpop.f32.mrb[0].mxu0
    %1192 = vdwg.mxu0
    %v1193 = vmax.f32 %v1190, 0.0
    %s1194 = scalar_lea.vmem %s5, 256
    %v1195 = vld [vmem:[%s1194] sm:$0xff]
    %v1196 = vld [vmem:[%s1194 + $0x8] sm:$0xff]
    %v1197 = vld [vmem:[%s1194 + $0x10] sm:$0xff]
    %v1198 = vld [vmem:[%s1194 + $0x18] sm:$0xff]
    %v1199 = vld [vmem:[%s1194 + $0x20] sm:$0xff]
    %v1200 = vld [vmem:[%s1194 + $0x28] sm:$0xff]
    %v1201 = vld [vmem:[%s1194 + $0x30] sm:$0xff]
    %v1202 = vld [vmem:[%s1194 + $0x38] sm:$0xff]
    %v1203 = vld [vmem:[%s1194 + $0x40] sm:$0xff]
    %v1204 = vld [vmem:[%s1194 + $0x48] sm:$0xff]
    %v1205 = vld [vmem:[%s1194 + $0x50] sm:$0xff]
    %v1206 = vld [vmem:[%s1194 + $0x58] sm:$0xff]
    %v1207 = vld [vmem:[%s1194 + $0x60] sm:$0xff]
    %v1208 = vld [vmem:[%s1194 + $0x68] sm:$0xff]
    %v1209 = vld [vmem:[%s1194 + $0x70] sm:$0xff]
    %v1210 = vld [vmem:[%s1194 + $0x78] sm:$0xff]
    %s1211 = scalar_lea.vmem %s6, 2
    %v1212 = vld [vmem:[%s1211] sm:$0x1]
    %v1214 = vlaneseq
    %v1215 = vshrl.u32 %v1214, 7
    %v1216 = vsub.s32 0, %v1215
    %v1217 = vrot.slane %v1212, %v1216
    %1219 = vmatprep.subr.mxu0 0.0
    %1220 = vmatpush1.msra.mxu0 %v1195
    %1221 = vmatprep.subr.mxu0 0.0
    %1222 = vmatpush1.msra.mxu0 %v1196
    %1223 = vmatprep.subr.mxu0 0.0
    %1224 = vmatpush1.msra.mxu0 %v1197
    %1225 = vmatprep.subr.mxu0 0.0
    %1226 = vmatpush1.msra.mxu0 %v1198
    %1227 = vmatprep.subr.mxu0 0.0
    %1228 = vmatpush1.msra.mxu0 %v1199
    %1229 = vmatprep.subr.mxu0 0.0
    %1230 = vmatpush1.msra.mxu0 %v1200
    %1231 = vmatprep.subr.mxu0 0.0
    %1232 = vmatpush1.msra.mxu0 %v1201
    %1233 = vmatprep.subr.mxu0 0.0
    %1234 = vmatpush1.msra.mxu0 %v1202
    %1235 = vmatprep.subr.mxu0 0.0
    %1236 = vmatpush1.msra.mxu0 %v1203
    %1237 = vmatprep.subr.mxu0 0.0
    %1238 = vmatpush1.msra.mxu0 %v1204
    %1239 = vmatprep.subr.mxu0 0.0
    %1240 = vmatpush1.msra.mxu0 %v1205
    %1241 = vmatprep.subr.mxu0 0.0
    %1242 = vmatpush1.msra.mxu0 %v1206
    %1243 = vmatprep.subr.mxu0 0.0
    %1244 = vmatpush1.msra.mxu0 %v1207
    %1245 = vmatprep.subr.mxu0 0.0
    %1246 = vmatpush1.msra.mxu0 %v1208
    %1247 = vmatprep.subr.mxu0 0.0
    %1248 = vmatpush1.msra.mxu0 %v1209
    %1249 = vmatprep.subr.mxu0 0.0
    %1250 = vmatpush1.msra.mxu0 %v1210
    %1251 = vmatprep.subr.mxu0 0.0
    %1252 = vmatpush1.msra.mxu0 0.0
    %1253 = vmatprep.subr.mxu0 0.0
    %1254 = vmatpush1.msra.mxu0 0.0
    %1255 = vmatprep.subr.mxu0 0.0
    %1256 = vmatpush1.msra.mxu0 0.0
    %1257 = vmatprep.subr.mxu0 0.0
    %1258 = vmatpush1.msra.mxu0 0.0
    %1259 = vmatprep.subr.mxu0 0.0
    %1260 = vmatpush1.msra.mxu0 0.0
    %1261 = vmatprep.subr.mxu0 0.0
    %1262 = vmatpush1.msra.mxu0 0.0
    %1263 = vmatprep.subr.mxu0 0.0
    %1264 = vmatpush1.msra.mxu0 0.0
    %1265 = vmatprep.subr.mxu0 0.0
    %1266 = vmatpush1.msra.mxu0 0.0
    %1267 = vmatprep.subr.mxu0 0.0
    %1268 = vmatpush1.msra.mxu0 0.0
    %1269 = vmatprep.subr.mxu0 0.0
    %1270 = vmatpush1.msra.mxu0 0.0
    %1271 = vmatprep.subr.mxu0 0.0
    %1272 = vmatpush1.msra.mxu0 0.0
    %1273 = vmatprep.subr.mxu0 0.0
    %1274 = vmatpush1.msra.mxu0 0.0
    %1275 = vmatprep.subr.mxu0 0.0
    %1276 = vmatpush1.msra.mxu0 0.0
    %1277 = vmatprep.subr.mxu0 0.0
    %1278 = vmatpush1.msra.mxu0 0.0
    %1279 = vmatprep.subr.mxu0 0.0
    %1280 = vmatpush1.msra.mxu0 0.0
    %1281 = vmatprep.subr.mxu0 0.0
    %1282 = vmatpush1.msra.mxu0 0.0
    %1283 = vmatprep.mubr.f32.mxu0 0.0
    %1284 = vmatmul.mubr.f32.gmra.mrb[0].mxu0 %v1193
    %v1285 = vpop.f32.mrb[0].mxu0
    %v1286 = vadd.f32 %v1217, %v1285
    %v1287 = vpop.f32.mrb[0].mxu0
    %1288 = vdwg.mxu0
    %v1289 = vmax.f32 %v1286, 0.0
    %s1290 = scalar_lea.vmem %s7, 256
    %v1291 = vld [vmem:[%s1290] sm:$0xff]
    %v1292 = vld [vmem:[%s1290 + $0x8] sm:$0xff]
    %v1293 = vld [vmem:[%s1290 + $0x10] sm:$0xff]
    %v1294 = vld [vmem:[%s1290 + $0x18] sm:$0xff]
    %v1295 = vld [vmem:[%s1290 + $0x20] sm:$0xff]
    %v1296 = vld [vmem:[%s1290 + $0x28] sm:$0xff]
    %v1297 = vld [vmem:[%s1290 + $0x30] sm:$0xff]
    %v1298 = vld [vmem:[%s1290 + $0x38] sm:$0xff]
    %v1299 = vld [vmem:[%s1290 + $0x40] sm:$0xff]
    %v1300 = vld [vmem:[%s1290 + $0x48] sm:$0xff]
    %v1301 = vld [vmem:[%s1290 + $0x50] sm:$0xff]
    %v1302 = vld [vmem:[%s1290 + $0x58] sm:$0xff]
    %v1303 = vld [vmem:[%s1290 + $0x60] sm:$0xff]
    %v1304 = vld [vmem:[%s1290 + $0x68] sm:$0xff]
    %v1305 = vld [vmem:[%s1290 + $0x70] sm:$0xff]
    %v1306 = vld [vmem:[%s1290 + $0x78] sm:$0xff]
    %s1307 = scalar_lea.vmem %s8, 2
    %v1308 = vld [vmem:[%s1307] sm:$0x1]
    %v1310 = vlaneseq
    %v1311 = vshrl.u32 %v1310, 7
    %v1312 = vsub.s32 0, %v1311
    %v1313 = vrot.slane %v1308, %v1312
    %1315 = vmatprep.subr.mxu0 0.0
    %1316 = vmatpush1.msra.mxu0 %v1291
    %1317 = vmatprep.subr.mxu0 0.0
    %1318 = vmatpush1.msra.mxu0 %v1292
    %1319 = vmatprep.subr.mxu0 0.0
    %1320 = vmatpush1.msra.mxu0 %v1293
    %1321 = vmatprep.subr.mxu0 0.0
    %1322 = vmatpush1.msra.mxu0 %v1294
    %1323 = vmatprep.subr.mxu0 0.0
    %1324 = vmatpush1.msra.mxu0 %v1295
    %1325 = vmatprep.subr.mxu0 0.0
    %1326 = vmatpush1.msra.mxu0 %v1296
    %1327 = vmatprep.subr.mxu0 0.0
    %1328 = vmatpush1.msra.mxu0 %v1297
    %1329 = vmatprep.subr.mxu0 0.0
    %1330 = vmatpush1.msra.mxu0 %v1298
    %1331 = vmatprep.subr.mxu0 0.0
    %1332 = vmatpush1.msra.mxu0 %v1299
    %1333 = vmatprep.subr.mxu0 0.0
    %1334 = vmatpush1.msra.mxu0 %v1300
    %1335 = vmatprep.subr.mxu0 0.0
    %1336 = vmatpush1.msra.mxu0 %v1301
    %1337 = vmatprep.subr.mxu0 0.0
    %1338 = vmatpush1.msra.mxu0 %v1302
    %1339 = vmatprep.subr.mxu0 0.0
    %1340 = vmatpush1.msra.mxu0 %v1303
    %1341 = vmatprep.subr.mxu0 0.0
    %1342 = vmatpush1.msra.mxu0 %v1304
    %1343 = vmatprep.subr.mxu0 0.0
    %1344 = vmatpush1.msra.mxu0 %v1305
    %1345 = vmatprep.subr.mxu0 0.0
    %1346 = vmatpush1.msra.mxu0 %v1306
    %1347 = vmatprep.subr.mxu0 0.0
    %1348 = vmatpush1.msra.mxu0 0.0
    %1349 = vmatprep.subr.mxu0 0.0
    %1350 = vmatpush1.msra.mxu0 0.0
    %1351 = vmatprep.subr.mxu0 0.0
    %1352 = vmatpush1.msra.mxu0 0.0
    %1353 = vmatprep.subr.mxu0 0.0
    %1354 = vmatpush1.msra.mxu0 0.0
    %1355 = vmatprep.subr.mxu0 0.0
    %1356 = vmatpush1.msra.mxu0 0.0
    %1357 = vmatprep.subr.mxu0 0.0
    %1358 = vmatpush1.msra.mxu0 0.0
    %1359 = vmatprep.subr.mxu0 0.0
    %1360 = vmatpush1.msra.mxu0 0.0
    %1361 = vmatprep.subr.mxu0 0.0
    %1362 = vmatpush1.msra.mxu0 0.0
    %1363 = vmatprep.subr.mxu0 0.0
    %1364 = vmatpush1.msra.mxu0 0.0
    %1365 = vmatprep.subr.mxu0 0.0
    %1366 = vmatpush1.msra.mxu0 0.0
    %1367 = vmatprep.subr.mxu0 0.0
    %1368 = vmatpush1.msra.mxu0 0.0
    %1369 = vmatprep.subr.mxu0 0.0
    %1370 = vmatpush1.msra.mxu0 0.0
    %1371 = vmatprep.subr.mxu0 0.0
    %1372 = vmatpush1.msra.mxu0 0.0
    %1373 = vmatprep.subr.mxu0 0.0
    %1374 = vmatpush1.msra.mxu0 0.0
    %1375 = vmatprep.subr.mxu0 0.0
    %1376 = vmatpush1.msra.mxu0 0.0
    %1377 = vmatprep.subr.mxu0 0.0
    %1378 = vmatpush1.msra.mxu0 0.0
    %1379 = vmatprep.mubr.f32.mxu0 0.0
    %1380 = vmatmul.mubr.f32.gmra.mrb[0].mxu0 %v1289
    %v1381 = vpop.f32.mrb[0].mxu0
    %v1382 = vadd.f32 %v1313, %v1381
    %v1383 = vpop.f32.mrb[0].mxu0
    %1384 = vdwg.mxu0
    %s1385 = scalar_lea.vmem [#allocation2], 16
    %1386 = vst [vmem:[%s1385] sm:$0xff] %v1382
    %s1387 = scalar_lea.vmem %s9, 256
    %v1388 = vld [vmem:[%s1387] sm:$0xff]
    %v1389 = vld [vmem:[%s1387 + $0x8] sm:$0xff]
    %v1390 = vld [vmem:[%s1387 + $0x10] sm:$0xff]
    %v1391 = vld [vmem:[%s1387 + $0x18] sm:$0xff]
    %v1392 = vld [vmem:[%s1387 + $0x20] sm:$0xff]
    %v1393 = vld [vmem:[%s1387 + $0x28] sm:$0xff]
    %v1394 = vld [vmem:[%s1387 + $0x30] sm:$0xff]
    %v1395 = vld [vmem:[%s1387 + $0x38] sm:$0xff]
    %v1396 = vld [vmem:[%s1387 + $0x40] sm:$0xff]
    %v1397 = vld [vmem:[%s1387 + $0x48] sm:$0xff]
    %v1398 = vld [vmem:[%s1387 + $0x50] sm:$0xff]
    %v1399 = vld [vmem:[%s1387 + $0x58] sm:$0xff]
    %v1400 = vld [vmem:[%s1387 + $0x60] sm:$0xff]
    %v1401 = vld [vmem:[%s1387 + $0x68] sm:$0xff]
    %v1402 = vld [vmem:[%s1387 + $0x70] sm:$0xff]
    %v1403 = vld [vmem:[%s1387 + $0x78] sm:$0xff]
    %1404 = vmatprep.subr.mxu0 0.0
    %1405 = vmatpush1.msra.mxu0 %v1388
    %1406 = vmatprep.subr.mxu0 0.0
    %1407 = vmatpush1.msra.mxu0 %v1389
    %1408 = vmatprep.subr.mxu0 0.0
    %1409 = vmatpush1.msra.mxu0 %v1390
    %1410 = vmatprep.subr.mxu0 0.0
    %1411 = vmatpush1.msra.mxu0 %v1391
    %1412 = vmatprep.subr.mxu0 0.0
    %1413 = vmatpush1.msra.mxu0 %v1392
    %1414 = vmatprep.subr.mxu0 0.0
    %1415 = vmatpush1.msra.mxu0 %v1393
    %1416 = vmatprep.subr.mxu0 0.0
    %1417 = vmatpush1.msra.mxu0 %v1394
    %1418 = vmatprep.subr.mxu0 0.0
    %1419 = vmatpush1.msra.mxu0 %v1395
    %1420 = vmatprep.subr.mxu0 0.0
    %1421 = vmatpush1.msra.mxu0 %v1396
    %1422 = vmatprep.subr.mxu0 0.0
    %1423 = vmatpush1.msra.mxu0 %v1397
    %1424 = vmatprep.subr.mxu0 0.0
    %1425 = vmatpush1.msra.mxu0 %v1398
    %1426 = vmatprep.subr.mxu0 0.0
    %1427 = vmatpush1.msra.mxu0 %v1399
    %1428 = vmatprep.subr.mxu0 0.0
    %1429 = vmatpush1.msra.mxu0 %v1400
    %1430 = vmatprep.subr.mxu0 0.0
    %1431 = vmatpush1.msra.mxu0 %v1401
    %1432 = vmatprep.subr.mxu0 0.0
    %1433 = vmatpush1.msra.mxu0 %v1402
    %1434 = vmatprep.subr.mxu0 0.0
    %1435 = vmatpush1.msra.mxu0 %v1403
    %1436 = vmatprep.subr.mxu0 0.0
    %1437 = vmatpush1.msra.mxu0 0.0
    %1438 = vmatprep.subr.mxu0 0.0
    %1439 = vmatpush1.msra.mxu0 0.0
    %1440 = vmatprep.subr.mxu0 0.0
    %1441 = vmatpush1.msra.mxu0 0.0
    %1442 = vmatprep.subr.mxu0 0.0
    %1443 = vmatpush1.msra.mxu0 0.0
    %1444 = vmatprep.subr.mxu0 0.0
    %1445 = vmatpush1.msra.mxu0 0.0
    %1446 = vmatprep.subr.mxu0 0.0
    %1447 = vmatpush1.msra.mxu0 0.0
    %1448 = vmatprep.subr.mxu0 0.0
    %1449 = vmatpush1.msra.mxu0 0.0
    %1450 = vmatprep.subr.mxu0 0.0
    %1451 = vmatpush1.msra.mxu0 0.0
    %1452 = vmatprep.subr.mxu0 0.0
    %1453 = vmatpush1.msra.mxu0 0.0
    %1454 = vmatprep.subr.mxu0 0.0
    %1455 = vmatpush1.msra.mxu0 0.0
    %1456 = vmatprep.subr.mxu0 0.0
    %1457 = vmatpush1.msra.mxu0 0.0
    %1458 = vmatprep.subr.mxu0 0.0
    %1459 = vmatpush1.msra.mxu0 0.0
    %1460 = vmatprep.subr.mxu0 0.0
    %1461 = vmatpush1.msra.mxu0 0.0
    %1462 = vmatprep.subr.mxu0 0.0
    %1463 = vmatpush1.msra.mxu0 0.0
    %1464 = vmatprep.subr.mxu0 0.0
    %1465 = vmatpush1.msra.mxu0 0.0
    %1466 = vmatprep.subr.mxu0 0.0
    %1467 = vmatpush1.msra.mxu0 0.0
    %1468 = vmatprep.mubr.f32.mxu0 0.0
    %1469 = vmatmul.mubr.f32.gmra.mrb[0].mxu0 %v1382
    %v1470 = vpop.f32.mrb[0].mxu0
    %v1471 = vadd.f32 0.0, %v1470
    %v1472 = vpop.f32.mrb[0].mxu0
    %1473 = vdwg.mxu0
    %v1474 = vadd.f32 %v999, %v1471
    %v1475 = vld [vmem:[%s10] sm:$0x1]
    %v1477 = vlaneseq
    %v1478 = vshrl.u32 %v1477, 7
    %v1479 = vsub.s32 0, %v1478
    %v1480 = vrot.slane %v1475, %v1479
    %v1482 = vadd.f32 %v1474, %v1480
    %1483 = vst [vmem:[#allocation4] sm:$0xff] %v1482
    %v1484 = vld [vmem:[%s11] sm:$0xff]
    %v1485 = vld [vmem:[%s11 + $0x8] sm:$0xff]
    %v1486 = vld [vmem:[%s11 + $0x10] sm:$0xff]
    %v1487 = vld [vmem:[%s11 + $0x18] sm:$0xff]
    %v1488 = vld [vmem:[%s11 + $0x20] sm:$0xff]
    %v1489 = vld [vmem:[%s11 + $0x28] sm:$0xff]
    %v1490 = vld [vmem:[%s11 + $0x30] sm:$0xff]
    %v1491 = vld [vmem:[%s11 + $0x38] sm:$0xff]
    %v1492 = vld [vmem:[%s11 + $0x40] sm:$0xff]
    %v1493 = vld [vmem:[%s11 + $0x48] sm:$0xff]
    %v1494 = vld [vmem:[%s11 + $0x50] sm:$0xff]
    %v1495 = vld [vmem:[%s11 + $0x58] sm:$0xff]
    %v1496 = vld [vmem:[%s11 + $0x60] sm:$0xff]
    %v1497 = vld [vmem:[%s11 + $0x68] sm:$0xff]
    %v1498 = vld [vmem:[%s11 + $0x70] sm:$0xff]
    %v1499 = vld [vmem:[%s11 + $0x78] sm:$0xff]
    %v1500 = vld [vmem:[%s12] sm:$0x1]
    %v1502 = vlaneseq
    %v1503 = vshrl.u32 %v1502, 7
    %v1504 = vsub.s32 0, %v1503
    %v1505 = vrot.slane %v1500, %v1504
    %1507 = vmatprep.subr.mxu0 0.0
    %1508 = vmatpush1.msra.mxu0 %v1484
    %1509 = vmatprep.subr.mxu0 0.0
    %1510 = vmatpush1.msra.mxu0 %v1485
    %1511 = vmatprep.subr.mxu0 0.0
    %1512 = vmatpush1.msra.mxu0 %v1486
    %1513 = vmatprep.subr.mxu0 0.0
    %1514 = vmatpush1.msra.mxu0 %v1487
    %1515 = vmatprep.subr.mxu0 0.0
    %1516 = vmatpush1.msra.mxu0 %v1488
    %1517 = vmatprep.subr.mxu0 0.0
    %1518 = vmatpush1.msra.mxu0 %v1489
    %1519 = vmatprep.subr.mxu0 0.0
    %1520 = vmatpush1.msra.mxu0 %v1490
    %1521 = vmatprep.subr.mxu0 0.0
    %1522 = vmatpush1.msra.mxu0 %v1491
    %1523 = vmatprep.subr.mxu0 0.0
    %1524 = vmatpush1.msra.mxu0 %v1492
    %1525 = vmatprep.subr.mxu0 0.0
    %1526 = vmatpush1.msra.mxu0 %v1493
    %1527 = vmatprep.subr.mxu0 0.0
    %1528 = vmatpush1.msra.mxu0 %v1494
    %1529 = vmatprep.subr.mxu0 0.0
    %1530 = vmatpush1.msra.mxu0 %v1495
    %1531 = vmatprep.subr.mxu0 0.0
    %1532 = vmatpush1.msra.mxu0 %v1496
    %1533 = vmatprep.subr.mxu0 0.0
    %1534 = vmatpush1.msra.mxu0 %v1497
    %1535 = vmatprep.subr.mxu0 0.0
    %1536 = vmatpush1.msra.mxu0 %v1498
    %1537 = vmatprep.subr.mxu0 0.0
    %1538 = vmatpush1.msra.mxu0 %v1499
    %1539 = vmatprep.subr.mxu0 0.0
    %1540 = vmatpush1.msra.mxu0 0.0
    %1541 = vmatprep.subr.mxu0 0.0
    %1542 = vmatpush1.msra.mxu0 0.0
    %1543 = vmatprep.subr.mxu0 0.0
    %1544 = vmatpush1.msra.mxu0 0.0
    %1545 = vmatprep.subr.mxu0 0.0
    %1546 = vmatpush1.msra.mxu0 0.0
    %1547 = vmatprep.subr.mxu0 0.0
    %1548 = vmatpush1.msra.mxu0 0.0
    %1549 = vmatprep.subr.mxu0 0.0
    %1550 = vmatpush1.msra.mxu0 0.0
    %1551 = vmatprep.subr.mxu0 0.0
    %1552 = vmatpush1.msra.mxu0 0.0
    %1553 = vmatprep.subr.mxu0 0.0
    %1554 = vmatpush1.msra.mxu0 0.0
    %1555 = vmatprep.subr.mxu0 0.0
    %1556 = vmatpush1.msra.mxu0 0.0
    %1557 = vmatprep.subr.mxu0 0.0
    %1558 = vmatpush1.msra.mxu0 0.0
    %1559 = vmatprep.subr.mxu0 0.0
    %1560 = vmatpush1.msra.mxu0 0.0
    %1561 = vmatprep.subr.mxu0 0.0
    %1562 = vmatpush1.msra.mxu0 0.0
    %1563 = vmatprep.subr.mxu0 0.0
    %1564 = vmatpush1.msra.mxu0 0.0
    %1565 = vmatprep.subr.mxu0 0.0
    %1566 = vmatpush1.msra.mxu0 0.0
    %1567 = vmatprep.subr.mxu0 0.0
    %1568 = vmatpush1.msra.mxu0 0.0
    %1569 = vmatprep.subr.mxu0 0.0
    %1570 = vmatpush1.msra.mxu0 0.0
    %1571 = vmatprep.mubr.f32.mxu0 0.0
    %1572 = vmatmul.mubr.f32.gmra.mrb[0].mxu0 %v1482
    %v1573 = vpop.f32.mrb[0].mxu0
    %v1574 = vadd.f32 %v1505, %v1573
    %v1575 = vpop.f32.mrb[0].mxu0
    %1576 = vdwg.mxu0
    %v1577 = vmax.f32 %v1574, 0.0
    %v1578 = vld [vmem:[%s13] sm:$0xff]
    %v1579 = vld [vmem:[%s13 + $0x8] sm:$0xff]
    %v1580 = vld [vmem:[%s13 + $0x10] sm:$0xff]
    %v1581 = vld [vmem:[%s13 + $0x18] sm:$0xff]
    %v1582 = vld [vmem:[%s13 + $0x20] sm:$0xff]
    %v1583 = vld [vmem:[%s13 + $0x28] sm:$0xff]
    %v1584 = vld [vmem:[%s13 + $0x30] sm:$0xff]
    %v1585 = vld [vmem:[%s13 + $0x38] sm:$0xff]
    %v1586 = vld [vmem:[%s13 + $0x40] sm:$0xff]
    %v1587 = vld [vmem:[%s13 + $0x48] sm:$0xff]
    %v1588 = vld [vmem:[%s13 + $0x50] sm:$0xff]
    %v1589 = vld [vmem:[%s13 + $0x58] sm:$0xff]
    %v1590 = vld [vmem:[%s13 + $0x60] sm:$0xff]
    %v1591 = vld [vmem:[%s13 + $0x68] sm:$0xff]
    %v1592 = vld [vmem:[%s13 + $0x70] sm:$0xff]
    %v1593 = vld [vmem:[%s13 + $0x78] sm:$0xff]
    %v1594 = vld [vmem:[%s14] sm:$0x1]
    %v1596 = vlaneseq
    %v1597 = vshrl.u32 %v1596, 7
    %v1598 = vsub.s32 0, %v1597
    %v1599 = vrot.slane %v1594, %v1598
    %1601 = vmatprep.subr.mxu0 0.0
    %1602 = vmatpush1.msra.mxu0 %v1578
    %1603 = vmatprep.subr.mxu0 0.0
    %1604 = vmatpush1.msra.mxu0 %v1579
    %1605 = vmatprep.subr.mxu0 0.0
    %1606 = vmatpush1.msra.mxu0 %v1580
    %1607 = vmatprep.subr.mxu0 0.0
    %1608 = vmatpush1.msra.mxu0 %v1581
    %1609 = vmatprep.subr.mxu0 0.0
    %1610 = vmatpush1.msra.mxu0 %v1582
    %1611 = vmatprep.subr.mxu0 0.0
    %1612 = vmatpush1.msra.mxu0 %v1583
    %1613 = vmatprep.subr.mxu0 0.0
    %1614 = vmatpush1.msra.mxu0 %v1584
    %1615 = vmatprep.subr.mxu0 0.0
    %1616 = vmatpush1.msra.mxu0 %v1585
    %1617 = vmatprep.subr.mxu0 0.0
    %1618 = vmatpush1.msra.mxu0 %v1586
    %1619 = vmatprep.subr.mxu0 0.0
    %1620 = vmatpush1.msra.mxu0 %v1587
    %1621 = vmatprep.subr.mxu0 0.0
    %1622 = vmatpush1.msra.mxu0 %v1588
    %1623 = vmatprep.subr.mxu0 0.0
    %1624 = vmatpush1.msra.mxu0 %v1589
    %1625 = vmatprep.subr.mxu0 0.0
    %1626 = vmatpush1.msra.mxu0 %v1590
    %1627 = vmatprep.subr.mxu0 0.0
    %1628 = vmatpush1.msra.mxu0 %v1591
    %1629 = vmatprep.subr.mxu0 0.0
    %1630 = vmatpush1.msra.mxu0 %v1592
    %1631 = vmatprep.subr.mxu0 0.0
    %1632 = vmatpush1.msra.mxu0 %v1593
    %1633 = vmatprep.subr.mxu0 0.0
    %1634 = vmatpush1.msra.mxu0 0.0
    %1635 = vmatprep.subr.mxu0 0.0
    %1636 = vmatpush1.msra.mxu0 0.0
    %1637 = vmatprep.subr.mxu0 0.0
    %1638 = vmatpush1.msra.mxu0 0.0
    %1639 = vmatprep.subr.mxu0 0.0
    %1640 = vmatpush1.msra.mxu0 0.0
    %1641 = vmatprep.subr.mxu0 0.0
    %1642 = vmatpush1.msra.mxu0 0.0
    %1643 = vmatprep.subr.mxu0 0.0
    %1644 = vmatpush1.msra.mxu0 0.0
    %1645 = vmatprep.subr.mxu0 0.0
    %1646 = vmatpush1.msra.mxu0 0.0
    %1647 = vmatprep.subr.mxu0 0.0
    %1648 = vmatpush1.msra.mxu0 0.0
    %1649 = vmatprep.subr.mxu0 0.0
    %1650 = vmatpush1.msra.mxu0 0.0
    %1651 = vmatprep.subr.mxu0 0.0
    %1652 = vmatpush1.msra.mxu0 0.0
    %1653 = vmatprep.subr.mxu0 0.0
    %1654 = vmatpush1.msra.mxu0 0.0
    %1655 = vmatprep.subr.mxu0 0.0
    %1656 = vmatpush1.msra.mxu0 0.0
    %1657 = vmatprep.subr.mxu0 0.0
    %1658 = vmatpush1.msra.mxu0 0.0
    %1659 = vmatprep.subr.mxu0 0.0
    %1660 = vmatpush1.msra.mxu0 0.0
    %1661 = vmatprep.subr.mxu0 0.0
    %1662 = vmatpush1.msra.mxu0 0.0
    %1663 = vmatprep.subr.mxu0 0.0
    %1664 = vmatpush1.msra.mxu0 0.0
    %1665 = vmatprep.mubr.f32.mxu0 0.0
    %1666 = vmatmul.mubr.f32.gmra.mrb[0].mxu0 %v1577
    %v1667 = vpop.f32.mrb[0].mxu0
    %v1668 = vadd.f32 %v1599, %v1667
    %v1669 = vpop.f32.mrb[0].mxu0
    %1670 = vdwg.mxu0
    %v1671 = vmax.f32 %v1668, 0.0
    %v1672 = vld [vmem:[%s15] sm:$0xff]
    %v1673 = vld [vmem:[%s15 + $0x8] sm:$0xff]
    %v1674 = vld [vmem:[%s15 + $0x10] sm:$0xff]
    %v1675 = vld [vmem:[%s15 + $0x18] sm:$0xff]
    %v1676 = vld [vmem:[%s15 + $0x20] sm:$0xff]
    %v1677 = vld [vmem:[%s15 + $0x28] sm:$0xff]
    %v1678 = vld [vmem:[%s15 + $0x30] sm:$0xff]
    %v1679 = vld [vmem:[%s15 + $0x38] sm:$0xff]
    %v1680 = vld [vmem:[%s15 + $0x40] sm:$0xff]
    %v1681 = vld [vmem:[%s15 + $0x48] sm:$0xff]
    %v1682 = vld [vmem:[%s15 + $0x50] sm:$0xff]
    %v1683 = vld [vmem:[%s15 + $0x58] sm:$0xff]
    %v1684 = vld [vmem:[%s15 + $0x60] sm:$0xff]
    %v1685 = vld [vmem:[%s15 + $0x68] sm:$0xff]
    %v1686 = vld [vmem:[%s15 + $0x70] sm:$0xff]
    %v1687 = vld [vmem:[%s15 + $0x78] sm:$0xff]
    %v1688 = vld [vmem:[%s16] sm:$0x1]
    %v1690 = vlaneseq
    %v1691 = vshrl.u32 %v1690, 7
    %v1692 = vsub.s32 0, %v1691
    %v1693 = vrot.slane %v1688, %v1692
    %1695 = vmatprep.subr.mxu0 0.0
    %1696 = vmatpush1.msra.mxu0 %v1672
    %1697 = vmatprep.subr.mxu0 0.0
    %1698 = vmatpush1.msra.mxu0 %v1673
    %1699 = vmatprep.subr.mxu0 0.0
    %1700 = vmatpush1.msra.mxu0 %v1674
    %1701 = vmatprep.subr.mxu0 0.0
    %1702 = vmatpush1.msra.mxu0 %v1675
    %1703 = vmatprep.subr.mxu0 0.0
    %1704 = vmatpush1.msra.mxu0 %v1676
    %1705 = vmatprep.subr.mxu0 0.0
    %1706 = vmatpush1.msra.mxu0 %v1677
    %1707 = vmatprep.subr.mxu0 0.0
    %1708 = vmatpush1.msra.mxu0 %v1678
    %1709 = vmatprep.subr.mxu0 0.0
    %1710 = vmatpush1.msra.mxu0 %v1679
    %1711 = vmatprep.subr.mxu0 0.0
    %1712 = vmatpush1.msra.mxu0 %v1680
    %1713 = vmatprep.subr.mxu0 0.0
    %1714 = vmatpush1.msra.mxu0 %v1681
    %1715 = vmatprep.subr.mxu0 0.0
    %1716 = vmatpush1.msra.mxu0 %v1682
    %1717 = vmatprep.subr.mxu0 0.0
    %1718 = vmatpush1.msra.mxu0 %v1683
    %1719 = vmatprep.subr.mxu0 0.0
    %1720 = vmatpush1.msra.mxu0 %v1684
    %1721 = vmatprep.subr.mxu0 0.0
    %1722 = vmatpush1.msra.mxu0 %v1685
    %1723 = vmatprep.subr.mxu0 0.0
    %1724 = vmatpush1.msra.mxu0 %v1686
    %1725 = vmatprep.subr.mxu0 0.0
    %1726 = vmatpush1.msra.mxu0 %v1687
    %1727 = vmatprep.subr.mxu0 0.0
    %1728 = vmatpush1.msra.mxu0 0.0
    %1729 = vmatprep.subr.mxu0 0.0
    %1730 = vmatpush1.msra.mxu0 0.0
    %1731 = vmatprep.subr.mxu0 0.0
    %1732 = vmatpush1.msra.mxu0 0.0
    %1733 = vmatprep.subr.mxu0 0.0
    %1734 = vmatpush1.msra.mxu0 0.0
    %1735 = vmatprep.subr.mxu0 0.0
    %1736 = vmatpush1.msra.mxu0 0.0
    %1737 = vmatprep.subr.mxu0 0.0
    %1738 = vmatpush1.msra.mxu0 0.0
    %1739 = vmatprep.subr.mxu0 0.0
    %1740 = vmatpush1.msra.mxu0 0.0
    %1741 = vmatprep.subr.mxu0 0.0
    %1742 = vmatpush1.msra.mxu0 0.0
    %1743 = vmatprep.subr.mxu0 0.0
    %1744 = vmatpush1.msra.mxu0 0.0
    %1745 = vmatprep.subr.mxu0 0.0
    %1746 = vmatpush1.msra.mxu0 0.0
    %1747 = vmatprep.subr.mxu0 0.0
    %1748 = vmatpush1.msra.mxu0 0.0
    %1749 = vmatprep.subr.mxu0 0.0
    %1750 = vmatpush1.msra.mxu0 0.0
    %1751 = vmatprep.subr.mxu0 0.0
    %1752 = vmatpush1.msra.mxu0 0.0
    %1753 = vmatprep.subr.mxu0 0.0
    %1754 = vmatpush1.msra.mxu0 0.0
    %1755 = vmatprep.subr.mxu0 0.0
    %1756 = vmatpush1.msra.mxu0 0.0
    %1757 = vmatprep.subr.mxu0 0.0
    %1758 = vmatpush1.msra.mxu0 0.0
    %1759 = vmatprep.mubr.f32.mxu0 0.0
    %1760 = vmatmul.mubr.f32.gmra.mrb[0].mxu0 %v1671
    %v1761 = vpop.f32.mrb[0].mxu0
    %v1762 = vadd.f32 %v1693, %v1761
    %v1763 = vpop.f32.mrb[0].mxu0
    %1764 = vdwg.mxu0
    %v1765 = vmax.f32 %v1762, 0.0
    %v1766 = vld [vmem:[%s17] sm:$0xff]
    %v1767 = vld [vmem:[%s17 + $0x8] sm:$0xff]
    %v1768 = vld [vmem:[%s17 + $0x10] sm:$0xff]
    %v1769 = vld [vmem:[%s17 + $0x18] sm:$0xff]
    %v1770 = vld [vmem:[%s17 + $0x20] sm:$0xff]
    %v1771 = vld [vmem:[%s17 + $0x28] sm:$0xff]
    %v1772 = vld [vmem:[%s17 + $0x30] sm:$0xff]
    %v1773 = vld [vmem:[%s17 + $0x38] sm:$0xff]
    %v1774 = vld [vmem:[%s17 + $0x40] sm:$0xff]
    %v1775 = vld [vmem:[%s17 + $0x48] sm:$0xff]
    %v1776 = vld [vmem:[%s17 + $0x50] sm:$0xff]
    %v1777 = vld [vmem:[%s17 + $0x58] sm:$0xff]
    %v1778 = vld [vmem:[%s17 + $0x60] sm:$0xff]
    %v1779 = vld [vmem:[%s17 + $0x68] sm:$0xff]
    %v1780 = vld [vmem:[%s17 + $0x70] sm:$0xff]
    %v1781 = vld [vmem:[%s17 + $0x78] sm:$0xff]
    %v1782 = vld [vmem:[%s18] sm:$0x1]
    %v1784 = vlaneseq
    %v1785 = vshrl.u32 %v1784, 7
    %v1786 = vsub.s32 0, %v1785
    %v1787 = vrot.slane %v1782, %v1786
    %1789 = vmatprep.subr.mxu0 0.0
    %1790 = vmatpush1.msra.mxu0 %v1766
    %1791 = vmatprep.subr.mxu0 0.0
    %1792 = vmatpush1.msra.mxu0 %v1767
    %1793 = vmatprep.subr.mxu0 0.0
    %1794 = vmatpush1.msra.mxu0 %v1768
    %1795 = vmatprep.subr.mxu0 0.0
    %1796 = vmatpush1.msra.mxu0 %v1769
    %1797 = vmatprep.subr.mxu0 0.0
    %1798 = vmatpush1.msra.mxu0 %v1770
    %1799 = vmatprep.subr.mxu0 0.0
    %1800 = vmatpush1.msra.mxu0 %v1771
    %1801 = vmatprep.subr.mxu0 0.0
    %1802 = vmatpush1.msra.mxu0 %v1772
    %1803 = vmatprep.subr.mxu0 0.0
    %1804 = vmatpush1.msra.mxu0 %v1773
    %1805 = vmatprep.subr.mxu0 0.0
    %1806 = vmatpush1.msra.mxu0 %v1774
    %1807 = vmatprep.subr.mxu0 0.0
    %1808 = vmatpush1.msra.mxu0 %v1775
    %1809 = vmatprep.subr.mxu0 0.0
    %1810 = vmatpush1.msra.mxu0 %v1776
    %1811 = vmatprep.subr.mxu0 0.0
    %1812 = vmatpush1.msra.mxu0 %v1777
    %1813 = vmatprep.subr.mxu0 0.0
    %1814 = vmatpush1.msra.mxu0 %v1778
    %1815 = vmatprep.subr.mxu0 0.0
    %1816 = vmatpush1.msra.mxu0 %v1779
    %1817 = vmatprep.subr.mxu0 0.0
    %1818 = vmatpush1.msra.mxu0 %v1780
    %1819 = vmatprep.subr.mxu0 0.0
    %1820 = vmatpush1.msra.mxu0 %v1781
    %1821 = vmatprep.subr.mxu0 0.0
    %1822 = vmatpush1.msra.mxu0 0.0
    %1823 = vmatprep.subr.mxu0 0.0
    %1824 = vmatpush1.msra.mxu0 0.0
    %1825 = vmatprep.subr.mxu0 0.0
    %1826 = vmatpush1.msra.mxu0 0.0
    %1827 = vmatprep.subr.mxu0 0.0
    %1828 = vmatpush1.msra.mxu0 0.0
    %1829 = vmatprep.subr.mxu0 0.0
    %1830 = vmatpush1.msra.mxu0 0.0
    %1831 = vmatprep.subr.mxu0 0.0
    %1832 = vmatpush1.msra.mxu0 0.0
    %1833 = vmatprep.subr.mxu0 0.0
    %1834 = vmatpush1.msra.mxu0 0.0
    %1835 = vmatprep.subr.mxu0 0.0
    %1836 = vmatpush1.msra.mxu0 0.0
    %1837 = vmatprep.subr.mxu0 0.0
    %1838 = vmatpush1.msra.mxu0 0.0
    %1839 = vmatprep.subr.mxu0 0.0
    %1840 = vmatpush1.msra.mxu0 0.0
    %1841 = vmatprep.subr.mxu0 0.0
    %1842 = vmatpush1.msra.mxu0 0.0
    %1843 = vmatprep.subr.mxu0 0.0
    %1844 = vmatpush1.msra.mxu0 0.0
    %1845 = vmatprep.subr.mxu0 0.0
    %1846 = vmatpush1.msra.mxu0 0.0
    %1847 = vmatprep.subr.mxu0 0.0
    %1848 = vmatpush1.msra.mxu0 0.0
    %1849 = vmatprep.subr.mxu0 0.0
    %1850 = vmatpush1.msra.mxu0 0.0
    %1851 = vmatprep.subr.mxu0 0.0
    %1852 = vmatpush1.msra.mxu0 0.0
    %1853 = vmatprep.mubr.f32.mxu0 0.0
    %1854 = vmatmul.mubr.f32.gmra.mrb[0].mxu0 %v1765
    %v1855 = vpop.f32.mrb[0].mxu0
    %v1856 = vadd.f32 %v1787, %v1855
    %v1857 = vpop.f32.mrb[0].mxu0
    %1858 = vdwg.mxu0
    %1859 = vst [vmem:[#allocation6] sm:$0xff] %v1856
    // Predicated region
    $region78: #{imae_forward.1} parent=1 // pred_check
      _
    $region79: #{imae_forward.1} parent=1 // pred_check_branch
      %1861 = sbr.rel (0) target = $region81
    $region80: #{imae_forward.1} parent=1 // pred_region
      %s1863 = ssub.s32 384, 384
      %1864 = vsyncadd [#allocation3], %s1863
      %s1865 = sshll.u32 [#allocation2], 4
      %s1866 = int_to_ptr.vmem [resolvable:$true] %s1865
      %1871 = dma.vmem_to_hbm [thread:$0]  %s1866, 384, %s19, [#allocation3], 128, 128, 8
    $region81: #{imae_forward.1} parent=1 // pred_fallthru
      _
    // Predicated region
    $region82: #{imae_forward.1} parent=1 // pred_check
      _
    $region83: #{imae_forward.1} parent=1 // pred_check_branch
      %1873 = sbr.rel (0) target = $region85
    $region84: #{imae_forward.1} parent=1 // pred_region
      %s1875 = ssub.s32 128, 128
      %1876 = vsyncadd [#allocation5], %s1875
      %s1878 = sshll.u32 [#allocation4], 4
      %s1879 = int_to_ptr.vmem [resolvable:$true] %s1878
      %1881 = dma.vmem_to_hbm [thread:$0]  %s1879, 128, %s20, [#allocation5]
    $region85: #{imae_forward.1} parent=1 // pred_fallthru
      _
    // Predicated region
    $region86: #{imae_forward.1} parent=1 // pred_check
      _
    $region87: #{imae_forward.1} parent=1 // pred_check_branch
      %1883 = sbr.rel (0) target = $region89
    $region88: #{imae_forward.1} parent=1 // pred_region
      %s1885 = ssub.s32 128, 128
      %1886 = vsyncadd [#allocation5], %s1885
      %s1888 = sshll.u32 [#allocation6], 4
      %s1889 = int_to_ptr.vmem [resolvable:$true] %s1888
      %1891 = dma.vmem_to_hbm [thread:$0]  %s1889, 128, %s21, [#allocation5]
    $region89: #{imae_forward.1} parent=1 // pred_fallthru
      _
    // Predicated region
    $region90: #{imae_forward.1} parent=1 // pred_check
      _
    $region91: #{imae_forward.1} parent=1 // pred_check_branch
      %1893 = sbr.rel (0) target = $region93
    $region92: #{imae_forward.1} parent=1 // pred_region
      %1894 = dma.done [#allocation3], 384
    $region93: #{imae_forward.1} parent=1 // pred_fallthru
      _
    // Predicated region
    $region94: #{imae_forward.1} parent=1 // pred_check
      _
    $region95: #{imae_forward.1} parent=1 // pred_check_branch
      %1896 = sbr.rel (0) target = $region97
    $region96: #{imae_forward.1} parent=1 // pred_region
      %1897 = dma.done [#allocation5], 128
    $region97: #{imae_forward.1} parent=1 // pred_fallthru
      _
    // Predicated region
    $region98: #{imae_forward.1} parent=1 // pred_check
      _
    $region99: #{imae_forward.1} parent=1 // pred_check_branch
      %1899 = sbr.rel (0) target = $region101
    $region100: #{imae_forward.1} parent=1 // pred_region
      %1900 = dma.done [#allocation5], 128
    $region101: #{imae_forward.1} parent=1 // pred_fallthru
      _
    %1901 = vsyncpa [#allocation3], 1
    %1902 = vsyncpa [#allocation5], 1

</llo_original>
